<compile_context>
chip_gen: v5e
topology: v5e:2x2
jax: 0.10.0
libtpu: 0.0.40
codegen_flags: <defaults>
</compile_context>

<pallas_src>
from functools import partial

import jax
import jax.numpy as jnp
from jax.experimental import pallas as pl
from jax.experimental.pallas import tpu as pltpu


def _attention_pool_kernel(x_ref, pos_sp_ref, pos0_ref, wq_ref, bq_ref,
                           wkv_ref, bkv_ref, wc_ref, bc_ref, seg_ref,
                           segt_ref, out_ref, *, num_heads):
    # x_ref    : (B_TILE, HW, C)   spatial tokens (compute dtype, e.g. bf16)
    # pos_sp_ref: (HW, C)          positional embedding for spatial tokens
    # pos0_ref : (1, C) f32        positional embedding of the pooled token
    # wq_ref   : (C, C)            query weight (in, out) layout
    # wkv_ref  : (C, 2C)           fused key|value weight (in, out) layout
    # wc_ref   : (C, D_out)        c_proj weight (in, out) layout
    # b*_ref   : (1, X) f32        biases
    # seg_ref  : (C, H) f32        block-diagonal one-hot (channel -> head)
    # segt_ref : (H, C) f32        its transpose (head -> channel)
    # out_ref  : (B_TILE, D_out)
    f32 = jnp.float32
    B, HW, C = x_ref.shape
    H = num_heads
    hd = C // H
    scale = hd ** -0.5
    cdt = x_ref.dtype                                   # compute dtype (bf16/f32)

    x = x_ref[...]                                      # (B, HW, C) compute dtype

    # ---- pooled (mean) token: only token that needs a query projection ----
    pooled = jnp.mean(x.astype(f32), axis=1) + pos0_ref[...]          # (B, C) f32
    pooled_c = pooled.astype(cdt)
    q0 = (jnp.dot(pooled_c, wq_ref[...], preferred_element_type=f32)
          + bq_ref[...]) * scale                                       # (B, C)
    kv0 = (jnp.dot(pooled_c, wkv_ref[...], preferred_element_type=f32)
           + bkv_ref[...])                                             # (B, 2C)
    k0 = kv0[:, :C]
    v0 = kv0[:, C:]

    # ---- spatial tokens: one wide (B*HW, C) @ (C, 2C) MXU matmul ----
    toks = x + pos_sp_ref[...][None]                                   # (B, HW, C)
    kv = (jnp.dot(toks.reshape(B * HW, C), wkv_ref[...],
                  preferred_element_type=f32)
          + bkv_ref[...]).reshape(B, HW, 2 * C)                        # f32
    k = kv[:, :, :C]
    v = kv[:, :, C:]

    # ---- per-head scores via block-diagonal segment matmul (no head slicing) ----
    seg = seg_ref[...]                                                 # (C, H) f32
    s = jnp.dot((q0[:, None, :] * k).reshape(B * HW, C), seg,
                preferred_element_type=f32).reshape(B, HW, H)          # (B, HW, H)
    s0 = jnp.dot(q0 * k0, seg, preferred_element_type=f32)             # (B, H)

    # ---- softmax over {pooled} U spatial tokens, all f32, no pad rows ----
    m = jnp.maximum(jnp.max(s, axis=1), s0)                            # (B, H)
    p = jnp.exp(s - m[:, None, :])                                     # (B, HW, H)
    p0 = jnp.exp(s0 - m)                                               # (B, H)
    inv_den = pl.reciprocal(jnp.sum(p, axis=1) + p0, approx=True)      # EUP slot
    p = p * inv_den[:, None, :]
    p0 = p0 * inv_den

    # ---- expand per-head probs back to channel lanes, contract over tokens ----
    segt = segt_ref[...]                                               # (H, C) f32
    p_exp = jnp.dot(p.reshape(B * HW, H), segt,
                    preferred_element_type=f32).reshape(B, HW, C)
    p0_exp = jnp.dot(p0, segt, preferred_element_type=f32)             # (B, C)
    attn = jnp.sum(p_exp * v, axis=1) + p0_exp * v0                    # (B, C) f32

    out = (jnp.dot(attn.astype(cdt), wc_ref[...],
                   preferred_element_type=f32) + bc_ref[...])
    out_ref[...] = out.astype(out_ref.dtype)


def _const_spec(shape):
    """BlockSpec for a block that never changes across the grid: constant index
    map + single-buffered (no point double-buffering data fetched once)."""
    ndim = len(shape)
    index_map = lambda b: (0,) * ndim
    try:
        return pl.BlockSpec(shape, index_map, pipeline_mode=pl.Buffered(1))
    except TypeError:   # older jax without pipeline_mode: default double-buffering
        return pl.BlockSpec(shape, index_map)


def _pick_vmem_limit(needed_bytes):
    """Scoped-VMEM limit sized from resident buffers, capped below physical."""
    phys = 64 << 20                         # conservative default (v7x per-TC)
    try:
        phys = pltpu.get_tpu_info().vmem_capacity_bytes
    except Exception:
        pass
    want = max(int(needed_bytes * 1.25), 32 << 20)
    return int(min(want, phys - (8 << 20), 100 << 20))


def attention_pool_2d(x_nchw, params, num_heads, *, b_tile=8,
                      compute_dtype=jnp.bfloat16):
    """x_nchw: (N, C, H, W). Returns (N, output_dim) float32.

    b_tile: batch rows per grid step.  8-16 is right for v7x (64 MiB VMEM);
    can be raised to 16-32 on v5e/v6e once weights are single-buffered.
    """
    N, C, H, W = x_nchw.shape
    HW = H * W
    hd = C // num_heads
    cdt = compute_dtype
    f32 = jnp.float32

    pos = params["pos"].astype(f32)                       # (HW + 1, C)
    wq, bq = params["wq"], params["bq"]                   # torch (out, in), (out,)
    wk, bk = params["wk"], params["bk"]
    wv, bv = params["wv"], params["bv"]
    wc, bc = params["wc"], params["bc"]                   # (D_out, C), (D_out,)
    D_out = wc.shape[0]

    # (in, out) layouts; k|v fused; everything the MXU touches in compute dtype.
    wq_t = wq.T.astype(cdt)                               # (C, C)
    wkv = jnp.concatenate([wk.T, wv.T], axis=1).astype(cdt)   # (C, 2C)
    wc_t = wc.T.astype(cdt)                               # (C, D_out)
    bq2 = bq.reshape(1, C).astype(f32)
    bkv = jnp.concatenate([bk, bv]).reshape(1, 2 * C).astype(f32)
    bc2 = bc.reshape(1, D_out).astype(f32)

    pos0 = pos[0:1]                                       # (1, C) f32 (pooled token)
    pos_sp = pos[1:].astype(cdt)                          # (HW, C)

    # Block-diagonal one-hot head-segment matrices, precomputed once (f32 so the
    # precision-sensitive score reduction stays f32; a few KiB, DMA'd once).
    seg = (jnp.arange(C, dtype=jnp.int32)[:, None] // hd ==
           jnp.arange(num_heads, dtype=jnp.int32)[None, :]).astype(f32)  # (C, H)
    seg_t = jnp.transpose(seg)                                            # (H, C)

    # NCHW -> (N, HW, C) token layout, cast before the transpose (bf16 traffic).
    x_tok = jnp.transpose(x_nchw.astype(cdt).reshape(N, C, HW), (0, 2, 1))

    # Batch tiling: pad N to a multiple of b_tile (block second-last dim must be
    # a multiple of 8 or the full extent).
    b_tile = max(1, min(b_tile, N))
    if b_tile < N and b_tile % 8 != 0:
        b_tile = min(((b_tile + 7) // 8) * 8, N)
    n_pad = pl.cdiv(N, b_tile) * b_tile
    if n_pad != N:
        x_tok = jnp.concatenate(
            [x_tok, jnp.zeros((n_pad - N, HW, C), cdt)], axis=0)

    # Explicit scoped-VMEM budget from the resident buffers.
    cb = jnp.dtype(cdt).itemsize
    const_bytes = ((C * C + C * 2 * C + C * D_out + HW * C) * cb   # wq, wkv, wc, pos_sp
                   + (4 * C + D_out) * 4                           # biases + pos0
                   + 2 * C * num_heads * 4)                        # seg, seg_t
    stream_bytes = 2 * (b_tile * HW * C * cb + b_tile * D_out * 4)  # x / out (dbl-buf)
    act_bytes = 4 * b_tile * HW * 2 * C * 4                         # kv + temporaries
    vmem_limit = _pick_vmem_limit(const_bytes + stream_bytes + act_bytes)

    out = pl.pallas_call(
        partial(_attention_pool_kernel, num_heads=num_heads),
        out_shape=jax.ShapeDtypeStruct((n_pad, D_out), jnp.float32),
        grid_spec=pltpu.PrefetchScalarGridSpec(
            num_scalar_prefetch=0,
            grid=(n_pad // b_tile,),
            in_specs=[
                pl.BlockSpec((b_tile, HW, C), lambda b: (b, 0, 0)),  # x tokens
                _const_spec((HW, C)),                                # pos (spatial)
                _const_spec((1, C)),                                 # pos (pooled)
                _const_spec((C, C)),                                 # wq
                _const_spec((1, C)),                                 # bq
                _const_spec((C, 2 * C)),                             # wk|wv
                _const_spec((1, 2 * C)),                             # bk|bv
                _const_spec((C, D_out)),                             # wc
                _const_spec((1, D_out)),                             # bc
                _const_spec((C, num_heads)),                         # seg
                _const_spec((num_heads, C)),                         # seg_t
            ],
            out_specs=pl.BlockSpec((b_tile, D_out), lambda b: (b, 0)),
        ),
        compiler_params=pltpu.CompilerParams(
            dimension_semantics=("parallel",),
            vmem_limit_bytes=vmem_limit),
    )(x_tok, pos_sp, pos0, wq_t, bq2, wkv, bkv, wc_t, bc2, seg, seg_t)

    return out[:N]


def _reference(x_nchw, params, num_heads):
    """Pure-JAX mirror of the PyTorch forward (query-0 slice of full MHA)."""
    N, C, H, W = x_nchw.shape
    HW = H * W
    L = HW + 1
    pos = params["pos"]
    wq, bq = params["wq"], params["bq"]
    wk, bk = params["wk"], params["bk"]
    wv, bv = params["wv"], params["bv"]
    wc, bc = params["wc"], params["bc"]

    xs = jnp.transpose(x_nchw.reshape(N, C, HW), (2, 0, 1))          # (HW, N, C)
    xs = jnp.concatenate([xs.mean(axis=0, keepdims=True), xs], 0)    # (L, N, C)
    xs = xs + pos[:, None, :]

    hd = C // num_heads
    q = (xs[0] @ wq.T + bq).reshape(N, num_heads, hd) * hd ** -0.5   # (N, h, d)
    k = (jnp.einsum("lnc,dc->lnd", xs, wk) + bk).reshape(L, N, num_heads, hd)
    v = (jnp.einsum("lnc,dc->lnd", xs, wv) + bv).reshape(L, N, num_heads, hd)

    s = jnp.einsum("nhd,lnhd->nhl", q, k)
    p = jax.nn.softmax(s, axis=-1)
    o = jnp.einsum("nhl,lnhd->nhd", p, v).reshape(N, C)
    return o @ wc.T + bc


if __name__ == "__main__":
    # Shapes consistent with the module:
    #   spacial_dim=4 (HW=16), embed_dim=32, num_heads=4, output_dim=16,
    #   batch=16 (two batch-tiles of 8 -> grid of 2).
    N, C, H, W = 16, 32, 4, 4
    num_heads = 4
    D_out = 16
    L = H * W + 1

    key = jax.random.PRNGKey(0)
    ks = jax.random.split(key, 10)
    params = {
        "pos": jax.random.normal(ks[0], (L, C), jnp.float32) / C ** 0.5,
        "wq": jax.random.normal(ks[1], (C, C), jnp.float32) * 0.05,
        "bq": jax.random.normal(ks[2], (C,), jnp.float32) * 0.05,
        "wk": jax.random.normal(ks[3], (C, C), jnp.float32) * 0.05,
        "bk": jax.random.normal(ks[4], (C,), jnp.float32) * 0.05,
        "wv": jax.random.normal(ks[5], (C, C), jnp.float32) * 0.05,
        "bv": jax.random.normal(ks[6], (C,), jnp.float32) * 0.05,
        "wc": jax.random.normal(ks[7], (D_out, C), jnp.float32) * 0.05,
        "bc": jax.random.normal(ks[8], (D_out,), jnp.float32) * 0.05,
    }
    x = jax.random.normal(ks[9], (N, C, H, W), jnp.float32)

    ref = _reference(x, params, num_heads)

    # f32 compute path: validates the kernel algorithm tightly.
    out_f32 = jax.block_until_ready(
        attention_pool_2d(x, params, num_heads, compute_dtype=jnp.float32))
    assert out_f32.shape == (N, D_out), out_f32.shape
    err_f32 = float(jnp.max(jnp.abs(out_f32 - ref)))
    assert jnp.allclose(out_f32, ref, rtol=3e-3, atol=3e-3), err_f32

    # Production (bf16 MXU) path: softmax stays f32, looser tolerance for the
    # bf16 matmul inputs + approx (EUP) reciprocal.
    out_bf16 = jax.block_until_ready(
        attention_pool_2d(x, params, num_heads, compute_dtype=jnp.bfloat16))
    err_bf16 = float(jnp.max(jnp.abs(out_bf16 - ref)))
    assert jnp.allclose(out_bf16, ref, rtol=2e-2, atol=2e-2), err_bf16

    print("KERNEL_OK")
</pallas_src>

<mosaic_0001>
module attributes {stable_mosaic.version = 11 : i64} {
  func.func @_attention_pool_kernel(%arg0: i32, %arg1: memref<8x16x32xf32, #tpu.memory_space<vmem>>, %arg2: memref<16x32xf32, #tpu.memory_space<vmem>>, %arg3: memref<1x32xf32, #tpu.memory_space<vmem>>, %arg4: memref<32x32xf32, #tpu.memory_space<vmem>>, %arg5: memref<1x32xf32, #tpu.memory_space<vmem>>, %arg6: memref<32x64xf32, #tpu.memory_space<vmem>>, %arg7: memref<1x64xf32, #tpu.memory_space<vmem>>, %arg8: memref<32x16xf32, #tpu.memory_space<vmem>>, %arg9: memref<1x16xf32, #tpu.memory_space<vmem>>, %arg10: memref<32x4xf32, #tpu.memory_space<vmem>>, %arg11: memref<4x32xf32, #tpu.memory_space<vmem>>, %arg12: memref<8x16xf32, #tpu.memory_space<vmem>>) attributes {dimension_semantics = [#tpu.dimension_semantics<parallel>], iteration_bounds = array<i64: 2>, scalar_prefetch = 0 : i64, scratch_operands = 0 : i64, tpu.core_type = #tpu.core_type<tc>, window_params = [{transform_indices = @transform_0, window_bounds = array<i64: 8, 16, 32>}, {pipeline_mode = #tpu.pipeline_mode<synchronous>, transform_indices = @transform_1, window_bounds = array<i64: 16, 32>}, {pipeline_mode = #tpu.pipeline_mode<synchronous>, transform_indices = @transform_2, window_bounds = array<i64: 1, 32>}, {pipeline_mode = #tpu.pipeline_mode<synchronous>, transform_indices = @transform_3, window_bounds = array<i64: 32, 32>}, {pipeline_mode = #tpu.pipeline_mode<synchronous>, transform_indices = @transform_4, window_bounds = array<i64: 1, 32>}, {pipeline_mode = #tpu.pipeline_mode<synchronous>, transform_indices = @transform_5, window_bounds = array<i64: 32, 64>}, {pipeline_mode = #tpu.pipeline_mode<synchronous>, transform_indices = @transform_6, window_bounds = array<i64: 1, 64>}, {pipeline_mode = #tpu.pipeline_mode<synchronous>, transform_indices = @transform_7, window_bounds = array<i64: 32, 16>}, {pipeline_mode = #tpu.pipeline_mode<synchronous>, transform_indices = @transform_8, window_bounds = array<i64: 1, 16>}, {pipeline_mode = #tpu.pipeline_mode<synchronous>, transform_indices = @transform_9, window_bounds = array<i64: 32, 4>}, {pipeline_mode = #tpu.pipeline_mode<synchronous>, transform_indices = @transform_10, window_bounds = array<i64: 4, 32>}, {transform_indices = @transform_11, window_bounds = array<i64: 8, 16>}]} {
    %c0 = arith.constant 0 : index
    %c0_0 = arith.constant 0 : index
    %c0_1 = arith.constant 0 : index
    %0 = vector.load %arg1[%c0, %c0_0, %c0_1] : memref<8x16x32xf32, #tpu.memory_space<vmem>>, vector<8x16x32xf32>
    %cst = arith.constant dense<0.000000e+00> : vector<8x32xf32>
    %1 = vector.multi_reduction <add>, %0, %cst [1] : vector<8x16x32xf32> to vector<8x32xf32>
    %cst_2 = arith.constant 1.600000e+01 : f32
    %2 = vector.broadcast %cst_2 : f32 to vector<8x32xf32>
    %3 = arith.divf %1, %2 : vector<8x32xf32>
    %c0_3 = arith.constant 0 : index
    %c0_4 = arith.constant 0 : index
    %4 = vector.load %arg3[%c0_3, %c0_4] : memref<1x32xf32, #tpu.memory_space<vmem>>, vector<1x32xf32>
    %5 = vector.broadcast %4 : vector<1x32xf32> to vector<8x32xf32>
    %6 = arith.addf %3, %5 : vector<8x32xf32>
    %c0_5 = arith.constant 0 : index
    %c0_6 = arith.constant 0 : index
    %7 = vector.load %arg4[%c0_5, %c0_6] : memref<32x32xf32, #tpu.memory_space<vmem>>, vector<32x32xf32>
    %cst_7 = arith.constant dense<0.000000e+00> : vector<8x32xf32>
    %8 = tpu.matmul %6, %7, %cst_7 {dimension_numbers = #tpu.dot_dimension_numbers<[1], [0], [0], [1], [0, 0, 1, 1], [], []>} : vector<8x32xf32>, vector<32x32xf32>, vector<8x32xf32> -> vector<8x32xf32>
    %c0_8 = arith.constant 0 : index
    %c0_9 = arith.constant 0 : index
    %9 = vector.load %arg5[%c0_8, %c0_9] : memref<1x32xf32, #tpu.memory_space<vmem>>, vector<1x32xf32>
    %10 = vector.broadcast %9 : vector<1x32xf32> to vector<8x32xf32>
    %11 = arith.addf %8, %10 : vector<8x32xf32>
    %cst_10 = arith.constant 0.353553385 : f32
    %12 = vector.broadcast %cst_10 : f32 to vector<8x32xf32>
    %13 = arith.mulf %11, %12 : vector<8x32xf32>
    %c0_11 = arith.constant 0 : index
    %c0_12 = arith.constant 0 : index
    %14 = vector.load %arg6[%c0_11, %c0_12] : memref<32x64xf32, #tpu.memory_space<vmem>>, vector<32x64xf32>
    %cst_13 = arith.constant dense<0.000000e+00> : vector<8x64xf32>
    %15 = tpu.matmul %6, %14, %cst_13 {dimension_numbers = #tpu.dot_dimension_numbers<[1], [0], [0], [1], [0, 0, 1, 1], [], []>} : vector<8x32xf32>, vector<32x64xf32>, vector<8x64xf32> -> vector<8x64xf32>
    %c0_14 = arith.constant 0 : index
    %c0_15 = arith.constant 0 : index
    %16 = vector.load %arg7[%c0_14, %c0_15] : memref<1x64xf32, #tpu.memory_space<vmem>>, vector<1x64xf32>
    %17 = vector.broadcast %16 : vector<1x64xf32> to vector<8x64xf32>
    %18 = arith.addf %15, %17 : vector<8x64xf32>
    %19 = vector.extract_strided_slice %18 {offsets = [0, 0], sizes = [8, 32], strides = [1, 1]} : vector<8x64xf32> to vector<8x32xf32>
    %20 = vector.extract_strided_slice %18 {offsets = [0, 32], sizes = [8, 32], strides = [1, 1]} : vector<8x64xf32> to vector<8x32xf32>
    %c0_16 = arith.constant 0 : index
    %c0_17 = arith.constant 0 : index
    %21 = vector.load %arg2[%c0_16, %c0_17] : memref<16x32xf32, #tpu.memory_space<vmem>>, vector<16x32xf32>
    %22 = vector.shape_cast %21 : vector<16x32xf32> to vector<1x16x32xf32>
    %23 = vector.broadcast %22 : vector<1x16x32xf32> to vector<8x16x32xf32>
    %24 = arith.addf %0, %23 : vector<8x16x32xf32>
    %25 = vector.shape_cast %24 : vector<8x16x32xf32> to vector<128x32xf32>
    %c0_18 = arith.constant 0 : index
    %c0_19 = arith.constant 0 : index
    %26 = vector.load %arg6[%c0_18, %c0_19] : memref<32x64xf32, #tpu.memory_space<vmem>>, vector<32x64xf32>
    %cst_20 = arith.constant dense<0.000000e+00> : vector<128x64xf32>
    %27 = tpu.matmul %25, %26, %cst_20 {dimension_numbers = #tpu.dot_dimension_numbers<[1], [0], [0], [1], [0, 0, 1, 1], [], []>} : vector<128x32xf32>, vector<32x64xf32>, vector<128x64xf32> -> vector<128x64xf32>
    %c0_21 = arith.constant 0 : index
    %c0_22 = arith.constant 0 : index
    %28 = vector.load %arg7[%c0_21, %c0_22] : memref<1x64xf32, #tpu.memory_space<vmem>>, vector<1x64xf32>
    %29 = vector.broadcast %28 : vector<1x64xf32> to vector<128x64xf32>
    %30 = arith.addf %27, %29 : vector<128x64xf32>
    %31 = vector.shape_cast %30 : vector<128x64xf32> to vector<8x16x64xf32>
    %32 = vector.extract_strided_slice %31 {offsets = [0, 0, 0], sizes = [8, 16, 32], strides = [1, 1, 1]} : vector<8x16x64xf32> to vector<8x16x32xf32>
    %33 = vector.extract_strided_slice %31 {offsets = [0, 0, 32], sizes = [8, 16, 32], strides = [1, 1, 1]} : vector<8x16x64xf32> to vector<8x16x32xf32>
    %c0_23 = arith.constant 0 : index
    %c0_24 = arith.constant 0 : index
    %34 = vector.load %arg10[%c0_23, %c0_24] : memref<32x4xf32, #tpu.memory_space<vmem>>, vector<32x4xf32>
    %35 = vector.shape_cast %13 : vector<8x32xf32> to vector<8x1x32xf32>
    %36 = vector.broadcast %35 : vector<8x1x32xf32> to vector<8x16x32xf32>
    %37 = arith.mulf %36, %32 : vector<8x16x32xf32>
    %38 = vector.shape_cast %37 : vector<8x16x32xf32> to vector<128x32xf32>
    %cst_25 = arith.constant dense<0.000000e+00> : vector<128x4xf32>
    %39 = tpu.matmul %38, %34, %cst_25 {dimension_numbers = #tpu.dot_dimension_numbers<[1], [0], [0], [1], [0, 0, 1, 1], [], []>} : vector<128x32xf32>, vector<32x4xf32>, vector<128x4xf32> -> vector<128x4xf32>
    %40 = vector.shape_cast %39 : vector<128x4xf32> to vector<8x16x4xf32>
    %41 = arith.mulf %13, %19 : vector<8x32xf32>
    %cst_26 = arith.constant dense<0.000000e+00> : vector<8x4xf32>
    %42 = tpu.matmul %41, %34, %cst_26 {dimension_numbers = #tpu.dot_dimension_numbers<[1], [0], [0], [1], [0, 0, 1, 1], [], []>} : vector<8x32xf32>, vector<32x4xf32>, vector<8x4xf32> -> vector<8x4xf32>
    %cst_27 = arith.constant dense<0xFF800000> : vector<8x4xf32>
    %43 = vector.multi_reduction <maximumf>, %40, %cst_27 [1] : vector<8x16x4xf32> to vector<8x4xf32>
    %44 = arith.maximumf %43, %42 : vector<8x4xf32>
    %45 = vector.shape_cast %44 : vector<8x4xf32> to vector<8x1x4xf32>
    %46 = vector.broadcast %45 : vector<8x1x4xf32> to vector<8x16x4xf32>
    %47 = arith.subf %40, %46 : vector<8x16x4xf32>
    %48 = math.exp %47 : vector<8x16x4xf32>
    %49 = arith.subf %42, %44 : vector<8x4xf32>
    %50 = math.exp %49 : vector<8x4xf32>
    %cst_28 = arith.constant dense<0.000000e+00> : vector<8x4xf32>
    %51 = vector.multi_reduction <add>, %48, %cst_28 [1] : vector<8x16x4xf32> to vector<8x4xf32>
    %52 = arith.addf %51, %50 : vector<8x4xf32>
    %53 = tpu.reciprocal %52 {approx = true} : vector<8x4xf32> -> vector<8x4xf32>
    %54 = vector.shape_cast %53 : vector<8x4xf32> to vector<8x1x4xf32>
    %55 = vector.broadcast %54 : vector<8x1x4xf32> to vector<8x16x4xf32>
    %56 = arith.mulf %48, %55 : vector<8x16x4xf32>
    %57 = arith.mulf %50, %53 : vector<8x4xf32>
    %c0_29 = arith.constant 0 : index
    %c0_30 = arith.constant 0 : index
    %58 = vector.load %arg11[%c0_29, %c0_30] : memref<4x32xf32, #tpu.memory_space<vmem>>, vector<4x32xf32>
    %59 = vector.shape_cast %56 : vector<8x16x4xf32> to vector<128x4xf32>
    %cst_31 = arith.constant dense<0.000000e+00> : vector<128x32xf32>
    %60 = tpu.matmul %59, %58, %cst_31 {dimension_numbers = #tpu.dot_dimension_numbers<[1], [0], [0], [1], [0, 0, 1, 1], [], []>} : vector<128x4xf32>, vector<4x32xf32>, vector<128x32xf32> -> vector<128x32xf32>
    %61 = vector.shape_cast %60 : vector<128x32xf32> to vector<8x16x32xf32>
    %cst_32 = arith.constant dense<0.000000e+00> : vector<8x32xf32>
    %62 = tpu.matmul %57, %58, %cst_32 {dimension_numbers = #tpu.dot_dimension_numbers<[1], [0], [0], [1], [0, 0, 1, 1], [], []>} : vector<8x4xf32>, vector<4x32xf32>, vector<8x32xf32> -> vector<8x32xf32>
    %63 = arith.mulf %61, %33 : vector<8x16x32xf32>
    %cst_33 = arith.constant dense<0.000000e+00> : vector<8x32xf32>
    %64 = vector.multi_reduction <add>, %63, %cst_33 [1] : vector<8x16x32xf32> to vector<8x32xf32>
    %65 = arith.mulf %62, %20 : vector<8x32xf32>
    %66 = arith.addf %64, %65 : vector<8x32xf32>
    %c0_34 = arith.constant 0 : index
    %c0_35 = arith.constant 0 : index
    %67 = vector.load %arg8[%c0_34, %c0_35] : memref<32x16xf32, #tpu.memory_space<vmem>>, vector<32x16xf32>
    %cst_36 = arith.constant dense<0.000000e+00> : vector<8x16xf32>
    %68 = tpu.matmul %66, %67, %cst_36 {dimension_numbers = #tpu.dot_dimension_numbers<[1], [0], [0], [1], [0, 0, 1, 1], [], []>} : vector<8x32xf32>, vector<32x16xf32>, vector<8x16xf32> -> vector<8x16xf32>
    %c0_37 = arith.constant 0 : index
    %c0_38 = arith.constant 0 : index
    %69 = vector.load %arg9[%c0_37, %c0_38] : memref<1x16xf32, #tpu.memory_space<vmem>>, vector<1x16xf32>
    %70 = vector.broadcast %69 : vector<1x16xf32> to vector<8x16xf32>
    %71 = arith.addf %68, %70 : vector<8x16xf32>
    %c0_39 = arith.constant 0 : index
    %c0_40 = arith.constant 0 : index
    %72 = vector.load %arg12[%c0_39, %c0_40] : memref<8x16xf32, #tpu.memory_space<vmem>>, vector<8x16xf32>
    tpu.vector_store %arg12[%c0_39, %c0_40], %71 {strides = array<i32>} : memref<8x16xf32, #tpu.memory_space<vmem>>, vector<8x16xf32>,
    return
  }
  func.func @transform_0(%arg0: i32) -> (i32, i32, i32) {
    %c0_i32 = arith.constant 0 : i32
    %c0_i32_0 = arith.constant 0 : i32
    %c0_i32_1 = arith.constant 0 : i32
    return %arg0, %c0_i32, %c0_i32_0 : i32, i32, i32
  }
  func.func @transform_1(%arg0: i32) -> (i32, i32) {
    %c0_i32 = arith.constant 0 : i32
    %c0_i32_0 = arith.constant 0 : i32
    %c0_i32_1 = arith.constant 0 : i32
    return %c0_i32, %c0_i32_0 : i32, i32
  }
  func.func @transform_2(%arg0: i32) -> (i32, i32) {
    %c0_i32 = arith.constant 0 : i32
    %c0_i32_0 = arith.constant 0 : i32
    %c0_i32_1 = arith.constant 0 : i32
    return %c0_i32, %c0_i32_0 : i32, i32
  }
  func.func @transform_3(%arg0: i32) -> (i32, i32) {
    %c0_i32 = arith.constant 0 : i32
    %c0_i32_0 = arith.constant 0 : i32
    %c0_i32_1 = arith.constant 0 : i32
    return %c0_i32, %c0_i32_0 : i32, i32
  }
  func.func @transform_4(%arg0: i32) -> (i32, i32) {
    %c0_i32 = arith.constant 0 : i32
    %c0_i32_0 = arith.constant 0 : i32
    %c0_i32_1 = arith.constant 0 : i32
    return %c0_i32, %c0_i32_0 : i32, i32
  }
  func.func @transform_5(%arg0: i32) -> (i32, i32) {
    %c0_i32 = arith.constant 0 : i32
    %c0_i32_0 = arith.constant 0 : i32
    %c0_i32_1 = arith.constant 0 : i32
    return %c0_i32, %c0_i32_0 : i32, i32
  }
  func.func @transform_6(%arg0: i32) -> (i32, i32) {
    %c0_i32 = arith.constant 0 : i32
    %c0_i32_0 = arith.constant 0 : i32
    %c0_i32_1 = arith.constant 0 : i32
    return %c0_i32, %c0_i32_0 : i32, i32
  }
  func.func @transform_7(%arg0: i32) -> (i32, i32) {
    %c0_i32 = arith.constant 0 : i32
    %c0_i32_0 = arith.constant 0 : i32
    %c0_i32_1 = arith.constant 0 : i32
    return %c0_i32, %c0_i32_0 : i32, i32
  }
  func.func @transform_8(%arg0: i32) -> (i32, i32) {
    %c0_i32 = arith.constant 0 : i32
    %c0_i32_0 = arith.constant 0 : i32
    %c0_i32_1 = arith.constant 0 : i32
    return %c0_i32, %c0_i32_0 : i32, i32
  }
  func.func @transform_9(%arg0: i32) -> (i32, i32) {
    %c0_i32 = arith.constant 0 : i32
    %c0_i32_0 = arith.constant 0 : i32
    %c0_i32_1 = arith.constant 0 : i32
    return %c0_i32, %c0_i32_0 : i32, i32
  }
  func.func @transform_10(%arg0: i32) -> (i32, i32) {
    %c0_i32 = arith.constant 0 : i32
    %c0_i32_0 = arith.constant 0 : i32
    %c0_i32_1 = arith.constant 0 : i32
    return %c0_i32, %c0_i32_0 : i32, i32
  }
  func.func @transform_11(%arg0: i32) -> (i32, i32) {
    %c0_i32 = arith.constant 0 : i32
    %c0_i32_0 = arith.constant 0 : i32
    return %arg0, %c0_i32 : i32, i32
  }
}

</mosaic_0001>

<llo_original>
// kernel: tpu_custom_call.1
$region0: #{tpu_custom_call.1}
  #allocation0 [shape = 'u32[]', space=smem, size = 0x4, offset = 0x4, fixed_abs, tag = 'smem constant byte address 0x4 - core index']
  #allocation1 [shape = 'u32[72,128]{1,0:T(1,128)}', space=vmem, size = 0x9000, scoped, tag = 'internal scratch']
  %s0 = inlined_call_operand.hbm [shape: f32[16,16,32], index: 0, kind: input, shape index: {}]
  %s1 = inlined_call_operand.vmem [shape: f32[16,32], index: 1, kind: input, shape index: {}]
  %s2 = inlined_call_operand.hbm [shape: f32[1,32], index: 2, kind: input, shape index: {}]
  %s3 = inlined_call_operand.vmem [shape: f32[32,32], index: 3, kind: input, shape index: {}]
  %s4 = inlined_call_operand.hbm [shape: f32[1,32], index: 4, kind: input, shape index: {}]
  %s5 = inlined_call_operand.vmem [shape: f32[32,64], index: 5, kind: input, shape index: {}]
  %s6 = inlined_call_operand.vmem [shape: f32[1,64], index: 6, kind: input, shape index: {}]
  %s7 = inlined_call_operand.vmem [shape: f32[32,16], index: 7, kind: input, shape index: {}]
  %s8 = inlined_call_operand.vmem [shape: f32[1,16], index: 8, kind: input, shape index: {}]
  %s9 = inlined_call_operand.vmem [shape: f32[32,4], index: 9, kind: input, shape index: {}]
  %s10 = inlined_call_operand.vmem [shape: f32[4,32], index: 10, kind: input, shape index: {}]
  %s11 = inlined_call_operand.hbm [shape: f32[16,16], index: 11, kind: output, shape index: {}]
  %s12 = sld [smem:[#allocation0]]
  $region89: #{tpu_custom_call.1} parent=0
    _
  %s14 = ssub.s32 1, %s12
  %s15 = scalar_select 0, %s14, %s12
  $region1: #{tpu_custom_call.1} parent=0
    #allocation2 [shape = 'u8[131072]{0}', space=vmem, size = 0x20000, scoped, tag = 'input window, operand 0']
    #allocation3 [shape = 's32[2]{0}', space=sflag, size = 0x8, scoped, tag = 'scoped memory for tpu_custom_call.1']
    #allocation4 [shape = 's32[2]{0}', space=sflag, size = 0x8, scoped, tag = 'scoped memory for tpu_custom_call.1']
    #allocation5 [shape = 'u8[512]{0}', space=vmem, size = 0x400, scoped, tag = 'input window, operand 2, single buffered']
    #allocation6 [shape = 's32[1]{0}', space=sflag, size = 0x4, scoped, tag = 'scoped memory for tpu_custom_call.1']
    #allocation7 [shape = 'u8[512]{0}', space=vmem, size = 0x400, scoped, tag = 'input window, operand 4, single buffered']
    #allocation8 [shape = 'u8[8192]{0}', space=vmem, size = 0x2000, scoped, tag = 'output window, operand 0']
    %16 = vsyncpa [#allocation3], 0
    %s17 = scalar_lea.sflag [#allocation3], 1
    %18 = vsyncpa %s17, 0
    %19 = vsyncpa [#allocation6], 0
    %20 = vsyncpa [#allocation4], 0
    %s21 = scalar_lea.sflag [#allocation4], 1
    %22 = vsyncpa %s21, 0
    loop: start=0, step=1, limit=4
    $region2: #{tpu_custom_call.1} parent=1 // loop_pre_header
      _
    $region3: #{tpu_custom_call.1} parent=1 // loop_header
      %s24 = sphi 0, %s28
      %p25 = scmp.ge.s32.totalorder %s24, 4
      %s34 = sphi 0, %s36
      %s37 = sphi 0, %s34
      %s38 = sphi 0, %s37
      %s54 = sphi 0, %s38
      %s58 = sphi 0, %s58
      %s60 = sphi 0, %s58
      %s61 = sphi 0, %s60
      %s75 = sphi 0, %s61
      %s79 = sphi 0, %s79
      %s81 = sphi 0, %s79
      %s82 = sphi 0, %s81
      %s96 = sphi 0, %s82
      %s100 = sphi 0, %s100
      %s102 = sphi 0, %s100
      %s103 = sphi 0, %s102
      %s117 = sphi 0, %s103
      %s121 = sphi 0, %s121
      %s123 = sphi 0, %s121
      %s124 = sphi 0, %s123
      %s138 = sphi 0, %s124
      %s142 = sphi 0, %s142
      %s144 = sphi 0, %s142
      %s145 = sphi 0, %s144
      %s159 = sphi 0, %s145
      %s163 = sphi 0, %s163
      %s165 = sphi 0, %s163
      %s166 = sphi 0, %s165
      %s180 = sphi 0, %s166
      %s184 = sphi 0, %s184
      %s186 = sphi 0, %s184
      %s187 = sphi 0, %s186
      %s201 = sphi 0, %s187
      %s205 = sphi 0, %s205
      %s207 = sphi 0, %s205
      %s208 = sphi 0, %s207
      %s222 = sphi 0, %s208
      %s226 = sphi 0, %s226
      %s228 = sphi 0, %s226
      %s229 = sphi 0, %s228
      %s243 = sphi 0, %s229
      %s247 = sphi 0, %s247
      %s249 = sphi 0, %s247
      %s250 = sphi 0, %s249
      %s264 = sphi 0, %s250
      %s270 = sphi 0, %s272
      %s273 = sphi 0, %s270
      %s274 = sphi 0, %s273
      %s290 = sphi 0, %s274
    $region4: #{tpu_custom_call.1} parent=1 // loop_header_branch
      %27 = sbr.rel (%p25) target = $region8
    $region5: #{tpu_custom_call.1} parent=1 // loop_body
      %s29 = ssub.s32 %s24, 1
      %s30 = ssub.s32 %s24, 2
      %s31 = sadd.s32 %s24, 1
      %s32 = ssub.s32 %s24, %s31
      %p33 = scmp.eq.s32.totalorder %s32, 0
      %s35 = sadd.s32 %s34, 1
      %s36 = scalar_select %p33, %s34, %s35
      %p39 = pneg %p33
      %p40 = scmp.eq.s32.totalorder %s24, 1
      %p41 = por %p39, %p40
      %p42 = scmp.ne.s32.totalorder %s34, %s37
      %p43 = scmp.eq.s32.totalorder %s24, 0
      %p44 = por %p42, %p43
      %p45 = scmp.ne.s32.totalorder %s34, %s37
      %p46 = scmp.eq.s32.totalorder %s29, 1
      %p47 = por %p45, %p46
      %p48 = scmp.ne.s32.totalorder %s37, %s38
      %p49 = scmp.eq.s32.totalorder %s29, 0
      %p50 = por %p48, %p49
      %p51 = scmp.ne.s32.totalorder %s37, %s38
      %p52 = scmp.eq.s32.totalorder %s30, 1
      %p53 = por %p51, %p52
      %p55 = scmp.ne.s32.totalorder %s38, %s54
      %p56 = scmp.eq.s32.totalorder %s30, 0
      %p57 = por %p55, %p56
      %s59 = sadd.s32 %s58, 1
      %p62 = scmp.eq.s32.totalorder %s24, 1
      %p63 = scmp.ne.s32.totalorder %s58, %s60
      %p64 = scmp.eq.s32.totalorder %s24, 0
      %p65 = por %p63, %p64
      %p66 = scmp.ne.s32.totalorder %s58, %s60
      %p67 = scmp.eq.s32.totalorder %s29, 1
      %p68 = por %p66, %p67
      %p69 = scmp.ne.s32.totalorder %s60, %s61
      %p70 = scmp.eq.s32.totalorder %s29, 0
      %p71 = por %p69, %p70
      %p72 = scmp.ne.s32.totalorder %s60, %s61
      %p73 = scmp.eq.s32.totalorder %s30, 1
      %p74 = por %p72, %p73
      %p76 = scmp.ne.s32.totalorder %s61, %s75
      %p77 = scmp.eq.s32.totalorder %s30, 0
      %p78 = por %p76, %p77
      %s80 = sadd.s32 %s79, 1
      %p83 = scmp.eq.s32.totalorder %s24, 1
      %p84 = scmp.ne.s32.totalorder %s79, %s81
      %p85 = scmp.eq.s32.totalorder %s24, 0
      %p86 = por %p84, %p85
      %p87 = scmp.ne.s32.totalorder %s79, %s81
      %p88 = scmp.eq.s32.totalorder %s29, 1
      %p89 = por %p87, %p88
      %p90 = scmp.ne.s32.totalorder %s81, %s82
      %p91 = scmp.eq.s32.totalorder %s29, 0
      %p92 = por %p90, %p91
      %p93 = scmp.ne.s32.totalorder %s81, %s82
      %p94 = scmp.eq.s32.totalorder %s30, 1
      %p95 = por %p93, %p94
      %p97 = scmp.ne.s32.totalorder %s82, %s96
      %p98 = scmp.eq.s32.totalorder %s30, 0
      %p99 = por %p97, %p98
      %s101 = sadd.s32 %s100, 1
      %p104 = scmp.eq.s32.totalorder %s24, 1
      %p105 = scmp.ne.s32.totalorder %s100, %s102
      %p106 = scmp.eq.s32.totalorder %s24, 0
      %p107 = por %p105, %p106
      %p108 = scmp.ne.s32.totalorder %s100, %s102
      %p109 = scmp.eq.s32.totalorder %s29, 1
      %p110 = por %p108, %p109
      %p111 = scmp.ne.s32.totalorder %s102, %s103
      %p112 = scmp.eq.s32.totalorder %s29, 0
      %p113 = por %p111, %p112
      %p114 = scmp.ne.s32.totalorder %s102, %s103
      %p115 = scmp.eq.s32.totalorder %s30, 1
      %p116 = por %p114, %p115
      %p118 = scmp.ne.s32.totalorder %s103, %s117
      %p119 = scmp.eq.s32.totalorder %s30, 0
      %p120 = por %p118, %p119
      %s122 = sadd.s32 %s121, 1
      %p125 = scmp.eq.s32.totalorder %s24, 1
      %p126 = scmp.ne.s32.totalorder %s121, %s123
      %p127 = scmp.eq.s32.totalorder %s24, 0
      %p128 = por %p126, %p127
      %p129 = scmp.ne.s32.totalorder %s121, %s123
      %p130 = scmp.eq.s32.totalorder %s29, 1
      %p131 = por %p129, %p130
      %p132 = scmp.ne.s32.totalorder %s123, %s124
      %p133 = scmp.eq.s32.totalorder %s29, 0
      %p134 = por %p132, %p133
      %p135 = scmp.ne.s32.totalorder %s123, %s124
      %p136 = scmp.eq.s32.totalorder %s30, 1
      %p137 = por %p135, %p136
      %p139 = scmp.ne.s32.totalorder %s124, %s138
      %p140 = scmp.eq.s32.totalorder %s30, 0
      %p141 = por %p139, %p140
      %s143 = sadd.s32 %s142, 1
      %p146 = scmp.eq.s32.totalorder %s24, 1
      %p147 = scmp.ne.s32.totalorder %s142, %s144
      %p148 = scmp.eq.s32.totalorder %s24, 0
      %p149 = por %p147, %p148
      %p150 = scmp.ne.s32.totalorder %s142, %s144
      %p151 = scmp.eq.s32.totalorder %s29, 1
      %p152 = por %p150, %p151
      %p153 = scmp.ne.s32.totalorder %s144, %s145
      %p154 = scmp.eq.s32.totalorder %s29, 0
      %p155 = por %p153, %p154
      %p156 = scmp.ne.s32.totalorder %s144, %s145
      %p157 = scmp.eq.s32.totalorder %s30, 1
      %p158 = por %p156, %p157
      %p160 = scmp.ne.s32.totalorder %s145, %s159
      %p161 = scmp.eq.s32.totalorder %s30, 0
      %p162 = por %p160, %p161
      %s164 = sadd.s32 %s163, 1
      %p167 = scmp.eq.s32.totalorder %s24, 1
      %p168 = scmp.ne.s32.totalorder %s163, %s165
      %p169 = scmp.eq.s32.totalorder %s24, 0
      %p170 = por %p168, %p169
      %p171 = scmp.ne.s32.totalorder %s163, %s165
      %p172 = scmp.eq.s32.totalorder %s29, 1
      %p173 = por %p171, %p172
      %p174 = scmp.ne.s32.totalorder %s165, %s166
      %p175 = scmp.eq.s32.totalorder %s29, 0
      %p176 = por %p174, %p175
      %p177 = scmp.ne.s32.totalorder %s165, %s166
      %p178 = scmp.eq.s32.totalorder %s30, 1
      %p179 = por %p177, %p178
      %p181 = scmp.ne.s32.totalorder %s166, %s180
      %p182 = scmp.eq.s32.totalorder %s30, 0
      %p183 = por %p181, %p182
      %s185 = sadd.s32 %s184, 1
      %p188 = scmp.eq.s32.totalorder %s24, 1
      %p189 = scmp.ne.s32.totalorder %s184, %s186
      %p190 = scmp.eq.s32.totalorder %s24, 0
      %p191 = por %p189, %p190
      %p192 = scmp.ne.s32.totalorder %s184, %s186
      %p193 = scmp.eq.s32.totalorder %s29, 1
      %p194 = por %p192, %p193
      %p195 = scmp.ne.s32.totalorder %s186, %s187
      %p196 = scmp.eq.s32.totalorder %s29, 0
      %p197 = por %p195, %p196
      %p198 = scmp.ne.s32.totalorder %s186, %s187
      %p199 = scmp.eq.s32.totalorder %s30, 1
      %p200 = por %p198, %p199
      %p202 = scmp.ne.s32.totalorder %s187, %s201
      %p203 = scmp.eq.s32.totalorder %s30, 0
      %p204 = por %p202, %p203
      %s206 = sadd.s32 %s205, 1
      %p209 = scmp.eq.s32.totalorder %s24, 1
      %p210 = scmp.ne.s32.totalorder %s205, %s207
      %p211 = scmp.eq.s32.totalorder %s24, 0
      %p212 = por %p210, %p211
      %p213 = scmp.ne.s32.totalorder %s205, %s207
      %p214 = scmp.eq.s32.totalorder %s29, 1
      %p215 = por %p213, %p214
      %p216 = scmp.ne.s32.totalorder %s207, %s208
      %p217 = scmp.eq.s32.totalorder %s29, 0
      %p218 = por %p216, %p217
      %p219 = scmp.ne.s32.totalorder %s207, %s208
      %p220 = scmp.eq.s32.totalorder %s30, 1
      %p221 = por %p219, %p220
      %p223 = scmp.ne.s32.totalorder %s208, %s222
      %p224 = scmp.eq.s32.totalorder %s30, 0
      %p225 = por %p223, %p224
      %s227 = sadd.s32 %s226, 1
      %p230 = scmp.eq.s32.totalorder %s24, 1
      %p231 = scmp.ne.s32.totalorder %s226, %s228
      %p232 = scmp.eq.s32.totalorder %s24, 0
      %p233 = por %p231, %p232
      %p234 = scmp.ne.s32.totalorder %s226, %s228
      %p235 = scmp.eq.s32.totalorder %s29, 1
      %p236 = por %p234, %p235
      %p237 = scmp.ne.s32.totalorder %s228, %s229
      %p238 = scmp.eq.s32.totalorder %s29, 0
      %p239 = por %p237, %p238
      %p240 = scmp.ne.s32.totalorder %s228, %s229
      %p241 = scmp.eq.s32.totalorder %s30, 1
      %p242 = por %p240, %p241
      %p244 = scmp.ne.s32.totalorder %s229, %s243
      %p245 = scmp.eq.s32.totalorder %s30, 0
      %p246 = por %p244, %p245
      %s248 = sadd.s32 %s247, 1
      %p251 = scmp.eq.s32.totalorder %s24, 1
      %p252 = scmp.ne.s32.totalorder %s247, %s249
      %p253 = scmp.eq.s32.totalorder %s24, 0
      %p254 = por %p252, %p253
      %p255 = scmp.ne.s32.totalorder %s247, %s249
      %p256 = scmp.eq.s32.totalorder %s29, 1
      %p257 = por %p255, %p256
      %p258 = scmp.ne.s32.totalorder %s249, %s250
      %p259 = scmp.eq.s32.totalorder %s29, 0
      %p260 = por %p258, %p259
      %p261 = scmp.ne.s32.totalorder %s249, %s250
      %p262 = scmp.eq.s32.totalorder %s30, 1
      %p263 = por %p261, %p262
      %p265 = scmp.ne.s32.totalorder %s250, %s264
      %p266 = scmp.eq.s32.totalorder %s30, 0
      %p267 = por %p265, %p266
      %s268 = ssub.s32 %s24, %s31
      %p269 = scmp.eq.s32.totalorder %s268, 0
      %s271 = sadd.s32 %s270, 1
      %s272 = scalar_select %p269, %s270, %s271
      %p275 = pneg %p269
      %p276 = scmp.eq.s32.totalorder %s24, 1
      %p277 = por %p275, %p276
      %p278 = scmp.ne.s32.totalorder %s270, %s273
      %p279 = scmp.eq.s32.totalorder %s24, 0
      %p280 = por %p278, %p279
      %p281 = scmp.ne.s32.totalorder %s270, %s273
      %p282 = scmp.eq.s32.totalorder %s29, 1
      %p283 = por %p281, %p282
      %p284 = scmp.ne.s32.totalorder %s273, %s274
      %p285 = scmp.eq.s32.totalorder %s29, 0
      %p286 = por %p284, %p285
      %p287 = scmp.ne.s32.totalorder %s273, %s274
      %p288 = scmp.eq.s32.totalorder %s30, 1
      %p289 = por %p287, %p288
      %p291 = scmp.ne.s32.totalorder %s274, %s290
      %p292 = scmp.eq.s32.totalorder %s30, 0
      %p293 = por %p291, %p292
      %p294 = scmp.le.s32.totalorder 1, %s24
      %p295 = scmp.lt.s32.totalorder %s24, 3
      %p296 = pnand %p294, %p295
      %p297 = pneg %p296
      // Predicated region
      $region9: #{tpu_custom_call.1} parent=5 // pred_check
        _
      $region10: #{tpu_custom_call.1} parent=5 // pred_check_branch
        %299 = sbr.rel (%p296) target = $region12
      $region11: #{tpu_custom_call.1} parent=5 // pred_region
        %s300 = ssub.s32 %s24, 1
        // Predicated region
        $region13: #{tpu_custom_call.1} parent=11 // pred_check
          %p301 = pneg %p71
        $region14: #{tpu_custom_call.1} parent=11 // pred_check_branch
          %303 = sbr.rel (%p301) target = $region16
        $region15: #{tpu_custom_call.1} parent=11 // pred_region
          _
        $region16: #{tpu_custom_call.1} parent=11 // pred_fallthru
          _
        // Predicated region
        $region17: #{tpu_custom_call.1} parent=11 // pred_check
          %p304 = pneg %p92
        $region18: #{tpu_custom_call.1} parent=11 // pred_check_branch
          %306 = sbr.rel (%p304) target = $region20
        $region19: #{tpu_custom_call.1} parent=11 // pred_region
          %308 = vsyncadd [#allocation6], 0
          %s310 = sshll.u32 %s2, 4
          %s311 = int_to_ptr.hbm [resolvable:$true] %s310
          %s312 = sshll.u32 [#allocation5], 4
          %s313 = int_to_ptr.vmem [resolvable:$true] %s312
          %315 = dma.hbm_to_vmem [thread:$0]  %s311, 16, %s313, [#allocation6]
        $region20: #{tpu_custom_call.1} parent=11 // pred_fallthru
          _
        // Predicated region
        $region21: #{tpu_custom_call.1} parent=11 // pred_check
          %p316 = pneg %p113
        $region22: #{tpu_custom_call.1} parent=11 // pred_check_branch
          %318 = sbr.rel (%p316) target = $region24
        $region23: #{tpu_custom_call.1} parent=11 // pred_region
          _
        $region24: #{tpu_custom_call.1} parent=11 // pred_fallthru
          _
        // Predicated region
        $region25: #{tpu_custom_call.1} parent=11 // pred_check
          %p319 = pneg %p134
        $region26: #{tpu_custom_call.1} parent=11 // pred_check_branch
          %321 = sbr.rel (%p319) target = $region28
        $region27: #{tpu_custom_call.1} parent=11 // pred_region
          %323 = vsyncadd [#allocation6], 0
          %s325 = sshll.u32 %s4, 4
          %s326 = int_to_ptr.hbm [resolvable:$true] %s325
          %s327 = sshll.u32 [#allocation7], 4
          %s328 = int_to_ptr.vmem [resolvable:$true] %s327
          %330 = dma.hbm_to_vmem [thread:$0]  %s326, 16, %s328, [#allocation6]
        $region28: #{tpu_custom_call.1} parent=11 // pred_fallthru
          _
        // Predicated region
        $region29: #{tpu_custom_call.1} parent=11 // pred_check
          %p331 = pneg %p155
        $region30: #{tpu_custom_call.1} parent=11 // pred_check_branch
          %333 = sbr.rel (%p331) target = $region32
        $region31: #{tpu_custom_call.1} parent=11 // pred_region
          _
        $region32: #{tpu_custom_call.1} parent=11 // pred_fallthru
          _
        // Predicated region
        $region33: #{tpu_custom_call.1} parent=11 // pred_check
          %p334 = pneg %p176
        $region34: #{tpu_custom_call.1} parent=11 // pred_check_branch
          %336 = sbr.rel (%p334) target = $region36
        $region35: #{tpu_custom_call.1} parent=11 // pred_region
          _
        $region36: #{tpu_custom_call.1} parent=11 // pred_fallthru
          _
        // Predicated region
        $region37: #{tpu_custom_call.1} parent=11 // pred_check
          %p337 = pneg %p197
        $region38: #{tpu_custom_call.1} parent=11 // pred_check_branch
          %339 = sbr.rel (%p337) target = $region40
        $region39: #{tpu_custom_call.1} parent=11 // pred_region
          _
        $region40: #{tpu_custom_call.1} parent=11 // pred_fallthru
          _
        // Predicated region
        $region41: #{tpu_custom_call.1} parent=11 // pred_check
          %p340 = pneg %p218
        $region42: #{tpu_custom_call.1} parent=11 // pred_check_branch
          %342 = sbr.rel (%p340) target = $region44
        $region43: #{tpu_custom_call.1} parent=11 // pred_region
          _
        $region44: #{tpu_custom_call.1} parent=11 // pred_fallthru
          _
        // Predicated region
        $region45: #{tpu_custom_call.1} parent=11 // pred_check
          %p343 = pneg %p239
        $region46: #{tpu_custom_call.1} parent=11 // pred_check_branch
          %345 = sbr.rel (%p343) target = $region48
        $region47: #{tpu_custom_call.1} parent=11 // pred_region
          _
        $region48: #{tpu_custom_call.1} parent=11 // pred_fallthru
          _
        // Predicated region
        $region49: #{tpu_custom_call.1} parent=11 // pred_check
          %p346 = pneg %p260
        $region50: #{tpu_custom_call.1} parent=11 // pred_check_branch
          %348 = sbr.rel (%p346) target = $region52
        $region51: #{tpu_custom_call.1} parent=11 // pred_region
          _
        $region52: #{tpu_custom_call.1} parent=11 // pred_fallthru
          _
      $region12: #{tpu_custom_call.1} parent=5 // pred_fallthru
        _
      %p349 = scmp.lt.s32.totalorder %s24, 2
      // Predicated region
      $region53: #{tpu_custom_call.1} parent=5 // pred_check
        %p350 = pneg %p349
      $region54: #{tpu_custom_call.1} parent=5 // pred_check_branch
        %352 = sbr.rel (%p350) target = $region56
      $region55: #{tpu_custom_call.1} parent=5 // pred_region
        // Predicated region
        $region57: #{tpu_custom_call.1} parent=55 // pred_check
          %p353 = pneg %p44
        $region58: #{tpu_custom_call.1} parent=55 // pred_check_branch
          %355 = sbr.rel (%p353) target = $region60
        $region59: #{tpu_custom_call.1} parent=55 // pred_region
          %s356 = sand.u32 %s34, 1
          %s357 = scalar_lea.sflag [#allocation3], %s356
          %s358 = sand.u32 %s34, 1
          %s359 = smul.addr %s358, 128
          %s360 = scalar_lea.vmem [#allocation2], %s359
          %s361 = smul.u32 8, %s24
          %363 = vsyncadd %s357, 0
          %s364 = smul.addr %s361, 2
          %s365 = smul.addr %s364, 8
          %s366 = scalar_lea.hbm %s0, %s365
          %s367 = sshll.u32 %s366, 4
          %s368 = int_to_ptr.hbm [resolvable:$true] %s367
          %s369 = sshll.u32 %s360, 4
          %s370 = int_to_ptr.vmem [resolvable:$true] %s369
          %375 = dma.hbm_to_vmem [thread:$0]  %s368, 2048, %s370, %s357, 128, 128, 8
        $region60: #{tpu_custom_call.1} parent=55 // pred_fallthru
          _
      $region56: #{tpu_custom_call.1} parent=5 // pred_fallthru
        _
      %p376 = scmp.le.s32.totalorder 1, %s24
      %p377 = scmp.lt.s32.totalorder %s24, 3
      %p378 = pnand %p376, %p377
      %p379 = pneg %p378
      // Predicated region
      $region61: #{tpu_custom_call.1} parent=5 // pred_check
        _
      $region62: #{tpu_custom_call.1} parent=5 // pred_check_branch
        %381 = sbr.rel (%p378) target = $region64
      $region63: #{tpu_custom_call.1} parent=5 // pred_region
        %s382 = ssub.s32 %s24, 1
        %s383 = sand.u32 %s37, 1
        %s384 = scalar_lea.sflag [#allocation3], %s383
        %s385 = sand.u32 %s37, 1
        %s386 = smul.addr %s385, 128
        %s387 = scalar_lea.vmem [#allocation2], %s386
        // Predicated region
        $region65: #{tpu_custom_call.1} parent=63 // pred_check
          %p388 = pneg %p50
        $region66: #{tpu_custom_call.1} parent=63 // pred_check_branch
          %390 = sbr.rel (%p388) target = $region68
        $region67: #{tpu_custom_call.1} parent=63 // pred_region
          %392 = dma.done %s384, 2048
        $region68: #{tpu_custom_call.1} parent=63 // pred_fallthru
          _
        // Predicated region
        $region69: #{tpu_custom_call.1} parent=63 // pred_check
          %p393 = pneg %p92
        $region70: #{tpu_custom_call.1} parent=63 // pred_check_branch
          %395 = sbr.rel (%p393) target = $region72
        $region71: #{tpu_custom_call.1} parent=63 // pred_region
          %397 = dma.done [#allocation6], 16
        $region72: #{tpu_custom_call.1} parent=63 // pred_fallthru
          _
        // Predicated region
        $region73: #{tpu_custom_call.1} parent=63 // pred_check
          %p398 = pneg %p134
        $region74: #{tpu_custom_call.1} parent=63 // pred_check_branch
          %400 = sbr.rel (%p398) target = $region76
        $region75: #{tpu_custom_call.1} parent=63 // pred_region
          %402 = dma.done [#allocation6], 16
        $region76: #{tpu_custom_call.1} parent=63 // pred_fallthru
          _
        %s403 = sand.u32 %s37, 1
        %s404 = scalar_lea.sflag [#allocation3], %s403
        %s405 = sand.u32 %s37, 1
        %s406 = smul.addr %s405, 128
        %s407 = scalar_lea.vmem [#allocation2], %s406
        %p408 = pneg %p50
        %p409 = pneg %p47
        %p410 = pneg %p71
        %p411 = pneg %p68
        %p412 = pneg %p92
        %p413 = pneg %p89
        %p414 = pneg %p113
        %p415 = pneg %p110
        %p416 = pneg %p134
        %p417 = pneg %p131
        %p418 = pneg %p155
        %p419 = pneg %p152
        %p420 = pneg %p176
        %p421 = pneg %p173
        %p422 = pneg %p197
        %p423 = pneg %p194
        %p424 = pneg %p218
        %p425 = pneg %p215
        %p426 = pneg %p239
        %p427 = pneg %p236
        %p428 = pneg %p260
        %p429 = pneg %p257
        %p430 = pneg %p286
        %p431 = pneg %p283
        %s432 = sand.u32 %s273, 1
        %s433 = scalar_lea.sflag [#allocation4], %s432
        %s434 = sand.u32 %s273, 1
        %s435 = smul.addr %s434, 8
        %s436 = scalar_lea.vmem [#allocation8], %s435
        %s437 = smul.u32 8, %s29
        %v438 = vld [vmem:[%s387] sm:$0xff]
        %v439 = vld [vmem:[%s387 + $0x8] sm:$0xff]
        %v440 = vld [vmem:[%s387 + $0x10] sm:$0xff]
        %v441 = vld [vmem:[%s387 + $0x18] sm:$0xff]
        %v442 = vld [vmem:[%s387 + $0x20] sm:$0xff]
        %v443 = vld [vmem:[%s387 + $0x28] sm:$0xff]
        %v444 = vld [vmem:[%s387 + $0x30] sm:$0xff]
        %v445 = vld [vmem:[%s387 + $0x38] sm:$0xff]
        %v446 = vld [vmem:[%s387 + $0x40] sm:$0xff]
        %v447 = vld [vmem:[%s387 + $0x48] sm:$0xff]
        %v448 = vld [vmem:[%s387 + $0x50] sm:$0xff]
        %v449 = vld [vmem:[%s387 + $0x58] sm:$0xff]
        %v450 = vld [vmem:[%s387 + $0x60] sm:$0xff]
        %v451 = vld [vmem:[%s387 + $0x68] sm:$0xff]
        %v452 = vld [vmem:[%s387 + $0x70] sm:$0xff]
        %v453 = vld [vmem:[%s387 + $0x78] sm:$0xff]
        %vm454 = vcmask 261120
        %v455 = vsel %vm454, %v438, 0.0
        %v456 = vsel %vm454, %v439, 0.0
        %v457 = vadd.f32 %v455, %v456
        %v458 = vrot.slane %v457, 4
        %v459 = vadd.f32 %v457, %v458
        %v460 = vrot.slane %v459, 2
        %v461 = vadd.f32 %v459, %v460
        %v462 = vrot.slane %v461, 1
        %v463 = vadd.f32 %v461, %v462
        %v464 = vsel %vm454, %v440, 0.0
        %v465 = vsel %vm454, %v441, 0.0
        %v466 = vadd.f32 %v464, %v465
        %v467 = vrot.slane %v466, 4
        %v468 = vadd.f32 %v466, %v467
        %v469 = vrot.slane %v468, 2
        %v470 = vadd.f32 %v468, %v469
        %v471 = vrot.slane %v470, 1
        %v472 = vadd.f32 %v470, %v471
        %v473 = vsel %vm454, %v442, 0.0
        %v474 = vsel %vm454, %v443, 0.0
        %v475 = vadd.f32 %v473, %v474
        %v476 = vrot.slane %v475, 4
        %v477 = vadd.f32 %v475, %v476
        %v478 = vrot.slane %v477, 2
        %v479 = vadd.f32 %v477, %v478
        %v480 = vrot.slane %v479, 1
        %v481 = vadd.f32 %v479, %v480
        %v482 = vsel %vm454, %v444, 0.0
        %v483 = vsel %vm454, %v445, 0.0
        %v484 = vadd.f32 %v482, %v483
        %v485 = vrot.slane %v484, 4
        %v486 = vadd.f32 %v484, %v485
        %v487 = vrot.slane %v486, 2
        %v488 = vadd.f32 %v486, %v487
        %v489 = vrot.slane %v488, 1
        %v490 = vadd.f32 %v488, %v489
        %v491 = vsel %vm454, %v446, 0.0
        %v492 = vsel %vm454, %v447, 0.0
        %v493 = vadd.f32 %v491, %v492
        %v494 = vrot.slane %v493, 4
        %v495 = vadd.f32 %v493, %v494
        %v496 = vrot.slane %v495, 2
        %v497 = vadd.f32 %v495, %v496
        %v498 = vrot.slane %v497, 1
        %v499 = vadd.f32 %v497, %v498
        %v500 = vsel %vm454, %v448, 0.0
        %v501 = vsel %vm454, %v449, 0.0
        %v502 = vadd.f32 %v500, %v501
        %v503 = vrot.slane %v502, 4
        %v504 = vadd.f32 %v502, %v503
        %v505 = vrot.slane %v504, 2
        %v506 = vadd.f32 %v504, %v505
        %v507 = vrot.slane %v506, 1
        %v508 = vadd.f32 %v506, %v507
        %v509 = vsel %vm454, %v450, 0.0
        %v510 = vsel %vm454, %v451, 0.0
        %v511 = vadd.f32 %v509, %v510
        %v512 = vrot.slane %v511, 4
        %v513 = vadd.f32 %v511, %v512
        %v514 = vrot.slane %v513, 2
        %v515 = vadd.f32 %v513, %v514
        %v516 = vrot.slane %v515, 1
        %v517 = vadd.f32 %v515, %v516
        %v518 = vsel %vm454, %v452, 0.0
        %v519 = vsel %vm454, %v453, 0.0
        %v520 = vadd.f32 %v518, %v519
        %v521 = vrot.slane %v520, 4
        %v522 = vadd.f32 %v520, %v521
        %v523 = vrot.slane %v522, 2
        %v524 = vadd.f32 %v522, %v523
        %v525 = vrot.slane %v524, 1
        %v526 = vadd.f32 %v524, %v525
        %v527 = vrcp.pop 16.0
        %v528 = vmul.f32 16.0, %v527
        %v529 = vsub.f32 1.0, %v528
        %v530 = vmul.f32 %v527, %v529
        %v531 = vadd.f32 %v527, %v530
        %vm532 = vweird.f32 %v527
        %v533 = vsel %vm532, %v527, %v531
        %v534 = vmul.f32 %v463, %v533
        %v535 = vmul.f32 %v472, %v533
        %v536 = vmul.f32 %v481, %v533
        %v537 = vmul.f32 %v490, %v533
        %v538 = vmul.f32 %v499, %v533
        %v539 = vmul.f32 %v508, %v533
        %v540 = vmul.f32 %v517, %v533
        %v541 = vmul.f32 %v526, %v533
        %v542 = vld [vmem:[#allocation5] sm:$0x1]
        %v544 = vperm.slane %v542, 0
        %v546 = vadd.f32 %v534, %v544
        %v547 = vadd.f32 %v535, %v544
        %v548 = vadd.f32 %v536, %v544
        %v549 = vadd.f32 %v537, %v544
        %v550 = vadd.f32 %v538, %v544
        %v551 = vadd.f32 %v539, %v544
        %v552 = vadd.f32 %v540, %v544
        %v553 = vadd.f32 %v541, %v544
        %v554 = vld [vmem:[%s3] sm:$0xff]
        %v555 = vld [vmem:[%s3 + $0x8] sm:$0xff]
        %v556 = vld [vmem:[%s3 + $0x10] sm:$0xff]
        %v557 = vld [vmem:[%s3 + $0x18] sm:$0xff]
        %v558 = vld [vmem:[#allocation7] sm:$0x1]
        %v560 = vperm.slane %v558, 0
        %v570 = vrot.slane %v547, 7
        %vm571 = vcmask 1041409
        %v572 = vsel %vm571, %v570, %v546
        %v573 = vrot.slane %v548, 6
        %vm574 = vcmask 1042434
        %v575 = vsel %vm574, %v573, %v572
        %v576 = vrot.slane %v549, 5
        %vm577 = vcmask 1043459
        %v578 = vsel %vm577, %v576, %v575
        %v579 = vrot.slane %v550, 4
        %vm580 = vcmask 1044484
        %v581 = vsel %vm580, %v579, %v578
        %v582 = vrot.slane %v551, 3
        %vm583 = vcmask 1045509
        %v584 = vsel %vm583, %v582, %v581
        %v585 = vrot.slane %v552, 2
        %vm586 = vcmask 1046534
        %v587 = vsel %vm586, %v585, %v584
        %v588 = vrot.slane %v553, 1
        %vm589 = vcmask 1047559
        %v590 = vsel %vm589, %v588, %v587
        %v591 = vsel %vm454, %v590, 0
        %593 = vmatpush.msra.mxu0 0.0
        %594 = vmatpush.msra.mxu0 0.0
        %595 = vmatpush.msra.mxu0 0.0
        %596 = vmatpush.msra.mxu0 0.0
        %597 = vmatpush.msra.mxu0 0.0
        %598 = vmatpush.msra.mxu0 0.0
        %599 = vmatpush.msra.mxu0 0.0
        %600 = vmatpush.msra.mxu0 0.0
        %601 = vmatpush.msra.mxu0 0.0
        %602 = vmatpush.msra.mxu0 0.0
        %603 = vmatpush.msra.mxu0 0.0
        %604 = vmatpush.msra.mxu0 0.0
        %605 = vmatpush.msra.mxu0 %v557
        %606 = vmatpush.msra.mxu0 %v556
        %607 = vmatpush.msra.mxu0 %v555
        %608 = vmatpush.msra.mxu0 %v554
        %609 = vmatmul.f32.gmra.mxu0 %v591
        %v610 = vpop.f32.mrf.mxu0
        %v611 = vadd.f32 %v560, %v610
        %612 = vdwg.mxu0
        %v613 = vmul.f32 %v611, 0.35355338
        %v614 = vld [vmem:[%s5] sm:$0xff]
        %v615 = vld [vmem:[%s5 + $0x8] sm:$0xff]
        %v616 = vld [vmem:[%s5 + $0x10] sm:$0xff]
        %v617 = vld [vmem:[%s5 + $0x18] sm:$0xff]
        %v618 = vld [vmem:[%s6] sm:$0x1]
        %v620 = vperm.slane %v618, 0
        %622 = vmatpush.msra.mxu0 0.0
        %623 = vmatpush.msra.mxu0 0.0
        %624 = vmatpush.msra.mxu0 0.0
        %625 = vmatpush.msra.mxu0 0.0
        %626 = vmatpush.msra.mxu0 0.0
        %627 = vmatpush.msra.mxu0 0.0
        %628 = vmatpush.msra.mxu0 0.0
        %629 = vmatpush.msra.mxu0 0.0
        %630 = vmatpush.msra.mxu0 0.0
        %631 = vmatpush.msra.mxu0 0.0
        %632 = vmatpush.msra.mxu0 0.0
        %633 = vmatpush.msra.mxu0 0.0
        %634 = vmatpush.msra.mxu0 %v617
        %635 = vmatpush.msra.mxu0 %v616
        %636 = vmatpush.msra.mxu0 %v615
        %637 = vmatpush.msra.mxu0 %v614
        %638 = vmatmul.f32.gmra.mxu0 %v591
        %v639 = vpop.f32.mrf.mxu0
        %v640 = vadd.f32 %v620, %v639
        %641 = vdwg.mxu0
        %v642 = vld [vmem:[%s1] sm:$0xff]
        %v643 = vld [vmem:[%s1 + $0x8] sm:$0xff]
        %v644 = vadd.f32 %v438, %v642
        %v645 = vadd.f32 %v439, %v643
        %v646 = vadd.f32 %v440, %v642
        %v647 = vadd.f32 %v441, %v643
        %v648 = vadd.f32 %v442, %v642
        %v649 = vadd.f32 %v443, %v643
        %v650 = vadd.f32 %v444, %v642
        %v651 = vadd.f32 %v445, %v643
        %v652 = vadd.f32 %v446, %v642
        %v653 = vadd.f32 %v447, %v643
        %v654 = vadd.f32 %v448, %v642
        %v655 = vadd.f32 %v449, %v643
        %v656 = vadd.f32 %v450, %v642
        %v657 = vadd.f32 %v451, %v643
        %v658 = vadd.f32 %v452, %v642
        %v659 = vadd.f32 %v453, %v643
        %v661 = vsel %vm454, %v644, 0
        %v664 = vsel %vm454, %v645, 0
        %v667 = vsel %vm454, %v646, 0
        %v670 = vsel %vm454, %v647, 0
        %v673 = vsel %vm454, %v648, 0
        %v676 = vsel %vm454, %v649, 0
        %v679 = vsel %vm454, %v650, 0
        %v682 = vsel %vm454, %v651, 0
        %v685 = vsel %vm454, %v652, 0
        %v688 = vsel %vm454, %v653, 0
        %v691 = vsel %vm454, %v654, 0
        %v694 = vsel %vm454, %v655, 0
        %v697 = vsel %vm454, %v656, 0
        %v700 = vsel %vm454, %v657, 0
        %v703 = vsel %vm454, %v658, 0
        %v706 = vsel %vm454, %v659, 0
        %708 = vmatpush.msra.mxu0 0.0
        %709 = vmatpush.msra.mxu0 0.0
        %710 = vmatpush.msra.mxu0 0.0
        %711 = vmatpush.msra.mxu0 0.0
        %712 = vmatpush.msra.mxu0 0.0
        %713 = vmatpush.msra.mxu0 0.0
        %714 = vmatpush.msra.mxu0 0.0
        %715 = vmatpush.msra.mxu0 0.0
        %716 = vmatpush.msra.mxu0 0.0
        %717 = vmatpush.msra.mxu0 0.0
        %718 = vmatpush.msra.mxu0 0.0
        %719 = vmatpush.msra.mxu0 0.0
        %720 = vmatpush.msra.mxu0 %v617
        %721 = vmatpush.msra.mxu0 %v616
        %722 = vmatpush.msra.mxu0 %v615
        %723 = vmatpush.msra.mxu0 %v614
        %724 = vmatmul.f32.gmra.mxu0 %v661
        %v725 = vpop.f32.mrf.mxu0
        %v726 = vadd.f32 %v620, %v725
        %727 = vmatmul.f32.gmra.mxu0 %v664
        %v728 = vpop.f32.mrf.mxu0
        %v729 = vadd.f32 %v620, %v728
        %730 = vmatmul.f32.gmra.mxu0 %v667
        %v731 = vpop.f32.mrf.mxu0
        %v732 = vadd.f32 %v620, %v731
        %733 = vmatmul.f32.gmra.mxu0 %v670
        %v734 = vpop.f32.mrf.mxu0
        %v735 = vadd.f32 %v620, %v734
        %736 = vmatmul.f32.gmra.mxu0 %v673
        %v737 = vpop.f32.mrf.mxu0
        %v738 = vadd.f32 %v620, %v737
        %739 = vmatmul.f32.gmra.mxu0 %v676
        %v740 = vpop.f32.mrf.mxu0
        %v741 = vadd.f32 %v620, %v740
        %742 = vmatmul.f32.gmra.mxu0 %v679
        %v743 = vpop.f32.mrf.mxu0
        %v744 = vadd.f32 %v620, %v743
        %745 = vmatmul.f32.gmra.mxu0 %v682
        %v746 = vpop.f32.mrf.mxu0
        %v747 = vadd.f32 %v620, %v746
        %748 = vmatmul.f32.gmra.mxu0 %v685
        %v749 = vpop.f32.mrf.mxu0
        %v750 = vadd.f32 %v620, %v749
        %751 = vmatmul.f32.gmra.mxu0 %v688
        %v752 = vpop.f32.mrf.mxu0
        %v753 = vadd.f32 %v620, %v752
        %754 = vmatmul.f32.gmra.mxu0 %v691
        %v755 = vpop.f32.mrf.mxu0
        %v756 = vadd.f32 %v620, %v755
        %757 = vmatmul.f32.gmra.mxu0 %v694
        %v758 = vpop.f32.mrf.mxu0
        %v759 = vadd.f32 %v620, %v758
        %760 = vmatmul.f32.gmra.mxu0 %v697
        %v761 = vpop.f32.mrf.mxu0
        %v762 = vadd.f32 %v620, %v761
        %763 = vmatmul.f32.gmra.mxu0 %v700
        %v764 = vpop.f32.mrf.mxu0
        %v765 = vadd.f32 %v620, %v764
        %766 = vmatmul.f32.gmra.mxu0 %v703
        %v767 = vpop.f32.mrf.mxu0
        %v768 = vadd.f32 %v620, %v767
        %769 = vmatmul.f32.gmra.mxu0 %v706
        %v770 = vpop.f32.mrf.mxu0
        %v771 = vadd.f32 %v620, %v770
        %772 = vdwg.mxu0
        %v773 = vld [vmem:[%s9] sm:$0xff]
        %v774 = vld [vmem:[%s9 + $0x8] sm:$0xff]
        %v775 = vld [vmem:[%s9 + $0x10] sm:$0xff]
        %v776 = vld [vmem:[%s9 + $0x18] sm:$0xff]
        %v778 = vrot.slane %v613, 1
        %v779 = vrot.slane %v613, 2
        %v780 = vrot.slane %v613, 3
        %v781 = vrot.slane %v613, 4
        %v782 = vrot.slane %v613, 5
        %v783 = vrot.slane %v613, 6
        %v784 = vrot.slane %v613, 7
        %v785 = vperm.slane %v613, 0
        %v786 = vperm.slane %v778, 0
        %v787 = vperm.slane %v779, 0
        %v788 = vperm.slane %v780, 0
        %v789 = vperm.slane %v781, 0
        %v790 = vperm.slane %v782, 0
        %v791 = vperm.slane %v783, 0
        %v792 = vperm.slane %v784, 0
        %v801 = vmul.f32 %v785, %v726
        %v802 = vmul.f32 %v785, %v729
        %v803 = vmul.f32 %v786, %v732
        %v804 = vmul.f32 %v786, %v735
        %v805 = vmul.f32 %v787, %v738
        %v806 = vmul.f32 %v787, %v741
        %v807 = vmul.f32 %v788, %v744
        %v808 = vmul.f32 %v788, %v747
        %v809 = vmul.f32 %v789, %v750
        %v810 = vmul.f32 %v789, %v753
        %v811 = vmul.f32 %v790, %v756
        %v812 = vmul.f32 %v790, %v759
        %v813 = vmul.f32 %v791, %v762
        %v814 = vmul.f32 %v791, %v765
        %v815 = vmul.f32 %v792, %v768
        %v816 = vmul.f32 %v792, %v771
        %v818 = vsel %vm454, %v801, 0
        %v821 = vsel %vm454, %v802, 0
        %v824 = vsel %vm454, %v803, 0
        %v827 = vsel %vm454, %v804, 0
        %v830 = vsel %vm454, %v805, 0
        %v833 = vsel %vm454, %v806, 0
        %v836 = vsel %vm454, %v807, 0
        %v839 = vsel %vm454, %v808, 0
        %v842 = vsel %vm454, %v809, 0
        %v845 = vsel %vm454, %v810, 0
        %v848 = vsel %vm454, %v811, 0
        %v851 = vsel %vm454, %v812, 0
        %v854 = vsel %vm454, %v813, 0
        %v857 = vsel %vm454, %v814, 0
        %v860 = vsel %vm454, %v815, 0
        %v863 = vsel %vm454, %v816, 0
        %865 = vmatpush.msra.mxu0 0.0
        %866 = vmatpush.msra.mxu0 0.0
        %867 = vmatpush.msra.mxu0 0.0
        %868 = vmatpush.msra.mxu0 0.0
        %869 = vmatpush.msra.mxu0 0.0
        %870 = vmatpush.msra.mxu0 0.0
        %871 = vmatpush.msra.mxu0 0.0
        %872 = vmatpush.msra.mxu0 0.0
        %873 = vmatpush.msra.mxu0 0.0
        %874 = vmatpush.msra.mxu0 0.0
        %875 = vmatpush.msra.mxu0 0.0
        %876 = vmatpush.msra.mxu0 0.0
        %877 = vmatpush.msra.mxu0 %v776
        %878 = vmatpush.msra.mxu0 %v775
        %879 = vmatpush.msra.mxu0 %v774
        %880 = vmatpush.msra.mxu0 %v773
        %881 = vmatmul.f32.gmra.mxu0 %v818
        %v882 = vpop.f32.mrf.mxu0
        %v883 = vadd.f32 0.0, %v882
        %884 = vmatmul.f32.gmra.mxu0 %v821
        %v885 = vpop.f32.mrf.mxu0
        %v886 = vadd.f32 0.0, %v885
        %887 = vmatmul.f32.gmra.mxu0 %v824
        %v888 = vpop.f32.mrf.mxu0
        %v889 = vadd.f32 0.0, %v888
        %890 = vmatmul.f32.gmra.mxu0 %v827
        %v891 = vpop.f32.mrf.mxu0
        %v892 = vadd.f32 0.0, %v891
        %893 = vmatmul.f32.gmra.mxu0 %v830
        %v894 = vpop.f32.mrf.mxu0
        %v895 = vadd.f32 0.0, %v894
        %896 = vmatmul.f32.gmra.mxu0 %v833
        %v897 = vpop.f32.mrf.mxu0
        %v898 = vadd.f32 0.0, %v897
        %899 = vmatmul.f32.gmra.mxu0 %v836
        %v900 = vpop.f32.mrf.mxu0
        %v901 = vadd.f32 0.0, %v900
        %902 = vmatmul.f32.gmra.mxu0 %v839
        %v903 = vpop.f32.mrf.mxu0
        %v904 = vadd.f32 0.0, %v903
        %905 = vmatmul.f32.gmra.mxu0 %v842
        %v906 = vpop.f32.mrf.mxu0
        %v907 = vadd.f32 0.0, %v906
        %908 = vmatmul.f32.gmra.mxu0 %v845
        %v909 = vpop.f32.mrf.mxu0
        %v910 = vadd.f32 0.0, %v909
        %911 = vmatmul.f32.gmra.mxu0 %v848
        %v912 = vpop.f32.mrf.mxu0
        %v913 = vadd.f32 0.0, %v912
        %914 = vmatmul.f32.gmra.mxu0 %v851
        %v915 = vpop.f32.mrf.mxu0
        %v916 = vadd.f32 0.0, %v915
        %917 = vmatmul.f32.gmra.mxu0 %v854
        %v918 = vpop.f32.mrf.mxu0
        %v919 = vadd.f32 0.0, %v918
        %920 = vmatmul.f32.gmra.mxu0 %v857
        %v921 = vpop.f32.mrf.mxu0
        %v922 = vadd.f32 0.0, %v921
        %923 = vmatmul.f32.gmra.mxu0 %v860
        %v924 = vpop.f32.mrf.mxu0
        %v925 = vadd.f32 0.0, %v924
        %926 = vmatmul.f32.gmra.mxu0 %v863
        %v927 = vpop.f32.mrf.mxu0
        %v928 = vadd.f32 0.0, %v927
        %929 = vdwg.mxu0
        %v930 = vmul.f32 %v613, %v640
        %v932 = vsel %vm454, %v930, 0
        %934 = vmatpush.msra.mxu0 0.0
        %935 = vmatpush.msra.mxu0 0.0
        %936 = vmatpush.msra.mxu0 0.0
        %937 = vmatpush.msra.mxu0 0.0
        %938 = vmatpush.msra.mxu0 0.0
        %939 = vmatpush.msra.mxu0 0.0
        %940 = vmatpush.msra.mxu0 0.0
        %941 = vmatpush.msra.mxu0 0.0
        %942 = vmatpush.msra.mxu0 0.0
        %943 = vmatpush.msra.mxu0 0.0
        %944 = vmatpush.msra.mxu0 0.0
        %945 = vmatpush.msra.mxu0 0.0
        %946 = vmatpush.msra.mxu0 %v776
        %947 = vmatpush.msra.mxu0 %v775
        %948 = vmatpush.msra.mxu0 %v774
        %949 = vmatpush.msra.mxu0 %v773
        %950 = vmatmul.f32.gmra.mxu0 %v932
        %v951 = vpop.f32.mrf.mxu0
        %v952 = vadd.f32 0.0, %v951
        %953 = vdwg.mxu0
        %vm954 = vcmask 31744
        %v955 = vsel %vm954, %v883, -inf
        %v956 = vsel %vm954, %v886, -inf
        %v957 = vmax.f32 %v955, %v956
        %v958 = vrot.slane %v957, 4
        %v959 = vmax.f32 %v957, %v958
        %v960 = vrot.slane %v959, 2
        %v961 = vmax.f32 %v959, %v960
        %v962 = vrot.slane %v961, 1
        %v963 = vmax.f32 %v961, %v962
        %v964 = vsel %vm954, %v889, -inf
        %v965 = vsel %vm954, %v892, -inf
        %v966 = vmax.f32 %v964, %v965
        %v967 = vrot.slane %v966, 4
        %v968 = vmax.f32 %v966, %v967
        %v969 = vrot.slane %v968, 2
        %v970 = vmax.f32 %v968, %v969
        %v971 = vrot.slane %v970, 1
        %v972 = vmax.f32 %v970, %v971
        %v973 = vsel %vm954, %v895, -inf
        %v974 = vsel %vm954, %v898, -inf
        %v975 = vmax.f32 %v973, %v974
        %v976 = vrot.slane %v975, 4
        %v977 = vmax.f32 %v975, %v976
        %v978 = vrot.slane %v977, 2
        %v979 = vmax.f32 %v977, %v978
        %v980 = vrot.slane %v979, 1
        %v981 = vmax.f32 %v979, %v980
        %v982 = vsel %vm954, %v901, -inf
        %v983 = vsel %vm954, %v904, -inf
        %v984 = vmax.f32 %v982, %v983
        %v985 = vrot.slane %v984, 4
        %v986 = vmax.f32 %v984, %v985
        %v987 = vrot.slane %v986, 2
        %v988 = vmax.f32 %v986, %v987
        %v989 = vrot.slane %v988, 1
        %v990 = vmax.f32 %v988, %v989
        %v991 = vsel %vm954, %v907, -inf
        %v992 = vsel %vm954, %v910, -inf
        %v993 = vmax.f32 %v991, %v992
        %v994 = vrot.slane %v993, 4
        %v995 = vmax.f32 %v993, %v994
        %v996 = vrot.slane %v995, 2
        %v997 = vmax.f32 %v995, %v996
        %v998 = vrot.slane %v997, 1
        %v999 = vmax.f32 %v997, %v998
        %v1000 = vsel %vm954, %v913, -inf
        %v1001 = vsel %vm954, %v916, -inf
        %v1002 = vmax.f32 %v1000, %v1001
        %v1003 = vrot.slane %v1002, 4
        %v1004 = vmax.f32 %v1002, %v1003
        %v1005 = vrot.slane %v1004, 2
        %v1006 = vmax.f32 %v1004, %v1005
        %v1007 = vrot.slane %v1006, 1
        %v1008 = vmax.f32 %v1006, %v1007
        %v1009 = vsel %vm954, %v919, -inf
        %v1010 = vsel %vm954, %v922, -inf
        %v1011 = vmax.f32 %v1009, %v1010
        %v1012 = vrot.slane %v1011, 4
        %v1013 = vmax.f32 %v1011, %v1012
        %v1014 = vrot.slane %v1013, 2
        %v1015 = vmax.f32 %v1013, %v1014
        %v1016 = vrot.slane %v1015, 1
        %v1017 = vmax.f32 %v1015, %v1016
        %v1018 = vsel %vm954, %v925, -inf
        %v1019 = vsel %vm954, %v928, -inf
        %v1020 = vmax.f32 %v1018, %v1019
        %v1021 = vrot.slane %v1020, 4
        %v1022 = vmax.f32 %v1020, %v1021
        %v1023 = vrot.slane %v1022, 2
        %v1024 = vmax.f32 %v1022, %v1023
        %v1025 = vrot.slane %v1024, 1
        %v1026 = vmax.f32 %v1024, %v1025
        %v1028 = vrot.slane %v952, 1
        %v1029 = vrot.slane %v952, 2
        %v1030 = vrot.slane %v952, 3
        %v1031 = vrot.slane %v952, 4
        %v1032 = vrot.slane %v952, 5
        %v1033 = vrot.slane %v952, 6
        %v1034 = vrot.slane %v952, 7
        %v1043 = vmax.f32 %v963, %v952
        %v1044 = vmax.f32 %v972, %v1028
        %v1045 = vmax.f32 %v981, %v1029
        %v1046 = vmax.f32 %v990, %v1030
        %v1047 = vmax.f32 %v999, %v1031
        %v1048 = vmax.f32 %v1008, %v1032
        %v1049 = vmax.f32 %v1017, %v1033
        %v1050 = vmax.f32 %v1026, %v1034
        %v1051 = vperm.slane %v1043, 0
        %v1052 = vperm.slane %v1044, 0
        %v1053 = vperm.slane %v1045, 0
        %v1054 = vperm.slane %v1046, 0
        %v1055 = vperm.slane %v1047, 0
        %v1056 = vperm.slane %v1048, 0
        %v1057 = vperm.slane %v1049, 0
        %v1058 = vperm.slane %v1050, 0
        %v1059 = vsub.f32 %v883, %v1051
        %v1060 = vsub.f32 %v886, %v1051
        %v1061 = vsub.f32 %v889, %v1052
        %v1062 = vsub.f32 %v892, %v1052
        %v1063 = vsub.f32 %v895, %v1053
        %v1064 = vsub.f32 %v898, %v1053
        %v1065 = vsub.f32 %v901, %v1054
        %v1066 = vsub.f32 %v904, %v1054
        %v1067 = vsub.f32 %v907, %v1055
        %v1068 = vsub.f32 %v910, %v1055
        %v1069 = vsub.f32 %v913, %v1056
        %v1070 = vsub.f32 %v916, %v1056
        %v1071 = vsub.f32 %v919, %v1057
        %v1072 = vsub.f32 %v922, %v1057
        %v1073 = vsub.f32 %v925, %v1058
        %v1074 = vsub.f32 %v928, %v1058
        %v1075 = vmul.f32 %v1059, 1.442695
        %v1076 = vpow.pop %v1075
        %v1077 = vmul.f32 %v1060, 1.442695
        %v1078 = vpow.pop %v1077
        %v1079 = vmul.f32 %v1061, 1.442695
        %v1080 = vpow.pop %v1079
        %v1081 = vmul.f32 %v1062, 1.442695
        %v1082 = vpow.pop %v1081
        %v1083 = vmul.f32 %v1063, 1.442695
        %v1084 = vpow.pop %v1083
        %v1085 = vmul.f32 %v1064, 1.442695
        %v1086 = vpow.pop %v1085
        %v1087 = vmul.f32 %v1065, 1.442695
        %v1088 = vpow.pop %v1087
        %v1089 = vmul.f32 %v1066, 1.442695
        %v1090 = vpow.pop %v1089
        %v1091 = vmul.f32 %v1067, 1.442695
        %v1092 = vpow.pop %v1091
        %v1093 = vmul.f32 %v1068, 1.442695
        %v1094 = vpow.pop %v1093
        %v1095 = vmul.f32 %v1069, 1.442695
        %v1096 = vpow.pop %v1095
        %v1097 = vmul.f32 %v1070, 1.442695
        %v1098 = vpow.pop %v1097
        %v1099 = vmul.f32 %v1071, 1.442695
        %v1100 = vpow.pop %v1099
        %v1101 = vmul.f32 %v1072, 1.442695
        %v1102 = vpow.pop %v1101
        %v1103 = vmul.f32 %v1073, 1.442695
        %v1104 = vpow.pop %v1103
        %v1105 = vmul.f32 %v1074, 1.442695
        %v1106 = vpow.pop %v1105
        %v1115 = vrot.slane %v1044, 7
        %v1116 = vsel %vm571, %v1115, %v1043
        %v1117 = vrot.slane %v1045, 6
        %v1118 = vsel %vm574, %v1117, %v1116
        %v1119 = vrot.slane %v1046, 5
        %v1120 = vsel %vm577, %v1119, %v1118
        %v1121 = vrot.slane %v1047, 4
        %v1122 = vsel %vm580, %v1121, %v1120
        %v1123 = vrot.slane %v1048, 3
        %v1124 = vsel %vm583, %v1123, %v1122
        %v1125 = vrot.slane %v1049, 2
        %v1126 = vsel %vm586, %v1125, %v1124
        %v1127 = vrot.slane %v1050, 1
        %v1128 = vsel %vm589, %v1127, %v1126
        %v1130 = vsub.f32 %v952, %v1128
        %v1131 = vmul.f32 %v1130, 1.442695
        %v1132 = vpow.pop %v1131
        %v1133 = vsel %vm954, %v1076, 0.0
        %v1134 = vsel %vm954, %v1078, 0.0
        %v1135 = vadd.f32 %v1133, %v1134
        %v1136 = vrot.slane %v1135, 4
        %v1137 = vadd.f32 %v1135, %v1136
        %v1138 = vrot.slane %v1137, 2
        %v1139 = vadd.f32 %v1137, %v1138
        %v1140 = vrot.slane %v1139, 1
        %v1141 = vadd.f32 %v1139, %v1140
        %v1142 = vsel %vm954, %v1080, 0.0
        %v1143 = vsel %vm954, %v1082, 0.0
        %v1144 = vadd.f32 %v1142, %v1143
        %v1145 = vrot.slane %v1144, 4
        %v1146 = vadd.f32 %v1144, %v1145
        %v1147 = vrot.slane %v1146, 2
        %v1148 = vadd.f32 %v1146, %v1147
        %v1149 = vrot.slane %v1148, 1
        %v1150 = vadd.f32 %v1148, %v1149
        %v1151 = vsel %vm954, %v1084, 0.0
        %v1152 = vsel %vm954, %v1086, 0.0
        %v1153 = vadd.f32 %v1151, %v1152
        %v1154 = vrot.slane %v1153, 4
        %v1155 = vadd.f32 %v1153, %v1154
        %v1156 = vrot.slane %v1155, 2
        %v1157 = vadd.f32 %v1155, %v1156
        %v1158 = vrot.slane %v1157, 1
        %v1159 = vadd.f32 %v1157, %v1158
        %v1160 = vsel %vm954, %v1088, 0.0
        %v1161 = vsel %vm954, %v1090, 0.0
        %v1162 = vadd.f32 %v1160, %v1161
        %v1163 = vrot.slane %v1162, 4
        %v1164 = vadd.f32 %v1162, %v1163
        %v1165 = vrot.slane %v1164, 2
        %v1166 = vadd.f32 %v1164, %v1165
        %v1167 = vrot.slane %v1166, 1
        %v1168 = vadd.f32 %v1166, %v1167
        %v1169 = vsel %vm954, %v1092, 0.0
        %v1170 = vsel %vm954, %v1094, 0.0
        %v1171 = vadd.f32 %v1169, %v1170
        %v1172 = vrot.slane %v1171, 4
        %v1173 = vadd.f32 %v1171, %v1172
        %v1174 = vrot.slane %v1173, 2
        %v1175 = vadd.f32 %v1173, %v1174
        %v1176 = vrot.slane %v1175, 1
        %v1177 = vadd.f32 %v1175, %v1176
        %v1178 = vsel %vm954, %v1096, 0.0
        %v1179 = vsel %vm954, %v1098, 0.0
        %v1180 = vadd.f32 %v1178, %v1179
        %v1181 = vrot.slane %v1180, 4
        %v1182 = vadd.f32 %v1180, %v1181
        %v1183 = vrot.slane %v1182, 2
        %v1184 = vadd.f32 %v1182, %v1183
        %v1185 = vrot.slane %v1184, 1
        %v1186 = vadd.f32 %v1184, %v1185
        %v1187 = vsel %vm954, %v1100, 0.0
        %v1188 = vsel %vm954, %v1102, 0.0
        %v1189 = vadd.f32 %v1187, %v1188
        %v1190 = vrot.slane %v1189, 4
        %v1191 = vadd.f32 %v1189, %v1190
        %v1192 = vrot.slane %v1191, 2
        %v1193 = vadd.f32 %v1191, %v1192
        %v1194 = vrot.slane %v1193, 1
        %v1195 = vadd.f32 %v1193, %v1194
        %v1196 = vsel %vm954, %v1104, 0.0
        %v1197 = vsel %vm954, %v1106, 0.0
        %v1198 = vadd.f32 %v1196, %v1197
        %v1199 = vrot.slane %v1198, 4
        %v1200 = vadd.f32 %v1198, %v1199
        %v1201 = vrot.slane %v1200, 2
        %v1202 = vadd.f32 %v1200, %v1201
        %v1203 = vrot.slane %v1202, 1
        %v1204 = vadd.f32 %v1202, %v1203
        %v1206 = vrot.slane %v1132, 1
        %v1207 = vrot.slane %v1132, 2
        %v1208 = vrot.slane %v1132, 3
        %v1209 = vrot.slane %v1132, 4
        %v1210 = vrot.slane %v1132, 5
        %v1211 = vrot.slane %v1132, 6
        %v1212 = vrot.slane %v1132, 7
        %v1221 = vadd.f32 %v1141, %v1132
        %v1222 = vadd.f32 %v1150, %v1206
        %v1223 = vadd.f32 %v1159, %v1207
        %v1224 = vadd.f32 %v1168, %v1208
        %v1225 = vadd.f32 %v1177, %v1209
        %v1226 = vadd.f32 %v1186, %v1210
        %v1227 = vadd.f32 %v1195, %v1211
        %v1228 = vadd.f32 %v1204, %v1212
        %v1229 = vrcp.pop %v1221
        %v1230 = vrcp.pop %v1222
        %v1231 = vrcp.pop %v1223
        %v1232 = vrcp.pop %v1224
        %v1233 = vrcp.pop %v1225
        %v1234 = vrcp.pop %v1226
        %v1235 = vrcp.pop %v1227
        %v1236 = vrcp.pop %v1228
        %v1237 = vperm.slane %v1229, 0
        %v1238 = vperm.slane %v1230, 0
        %v1239 = vperm.slane %v1231, 0
        %v1240 = vperm.slane %v1232, 0
        %v1241 = vperm.slane %v1233, 0
        %v1242 = vperm.slane %v1234, 0
        %v1243 = vperm.slane %v1235, 0
        %v1244 = vperm.slane %v1236, 0
        %v1245 = vmul.f32 %v1076, %v1237
        %v1246 = vmul.f32 %v1078, %v1237
        %v1247 = vmul.f32 %v1080, %v1238
        %v1248 = vmul.f32 %v1082, %v1238
        %v1249 = vmul.f32 %v1084, %v1239
        %v1250 = vmul.f32 %v1086, %v1239
        %v1251 = vmul.f32 %v1088, %v1240
        %v1252 = vmul.f32 %v1090, %v1240
        %v1253 = vmul.f32 %v1092, %v1241
        %v1254 = vmul.f32 %v1094, %v1241
        %v1255 = vmul.f32 %v1096, %v1242
        %v1256 = vmul.f32 %v1098, %v1242
        %v1257 = vmul.f32 %v1100, %v1243
        %v1258 = vmul.f32 %v1102, %v1243
        %v1259 = vmul.f32 %v1104, %v1244
        %v1260 = vmul.f32 %v1106, %v1244
        %v1269 = vrot.slane %v1230, 7
        %v1270 = vsel %vm571, %v1269, %v1229
        %v1271 = vrot.slane %v1231, 6
        %v1272 = vsel %vm574, %v1271, %v1270
        %v1273 = vrot.slane %v1232, 5
        %v1274 = vsel %vm577, %v1273, %v1272
        %v1275 = vrot.slane %v1233, 4
        %v1276 = vsel %vm580, %v1275, %v1274
        %v1277 = vrot.slane %v1234, 3
        %v1278 = vsel %vm583, %v1277, %v1276
        %v1279 = vrot.slane %v1235, 2
        %v1280 = vsel %vm586, %v1279, %v1278
        %v1281 = vrot.slane %v1236, 1
        %v1282 = vsel %vm589, %v1281, %v1280
        %v1284 = vmul.f32 %v1132, %v1282
        %v1285 = vld [vmem:[%s10] sm:$0xf]
        %v1287 = vsel %vm954, %v1245, 0
        %v1290 = vsel %vm954, %v1246, 0
        %v1293 = vsel %vm954, %v1247, 0
        %v1296 = vsel %vm954, %v1248, 0
        %v1299 = vsel %vm954, %v1249, 0
        %v1302 = vsel %vm954, %v1250, 0
        %v1305 = vsel %vm954, %v1251, 0
        %v1308 = vsel %vm954, %v1252, 0
        %v1311 = vsel %vm954, %v1253, 0
        %v1314 = vsel %vm954, %v1254, 0
        %v1317 = vsel %vm954, %v1255, 0
        %v1320 = vsel %vm954, %v1256, 0
        %v1323 = vsel %vm954, %v1257, 0
        %v1326 = vsel %vm954, %v1258, 0
        %v1329 = vsel %vm954, %v1259, 0
        %v1332 = vsel %vm954, %v1260, 0
        %vm1334 = vcmask 1043456
        %v1336 = vsel %vm1334, %v1285, 0
        %1338 = vmatpush.msra.mxu0 0.0
        %1339 = vmatpush.msra.mxu0 0.0
        %1340 = vmatpush.msra.mxu0 0.0
        %1341 = vmatpush.msra.mxu0 0.0
        %1342 = vmatpush.msra.mxu0 0.0
        %1343 = vmatpush.msra.mxu0 0.0
        %1344 = vmatpush.msra.mxu0 0.0
        %1345 = vmatpush.msra.mxu0 0.0
        %1346 = vmatpush.msra.mxu0 0.0
        %1347 = vmatpush.msra.mxu0 0.0
        %1348 = vmatpush.msra.mxu0 0.0
        %1349 = vmatpush.msra.mxu0 0.0
        %1350 = vmatpush.msra.mxu0 0.0
        %1351 = vmatpush.msra.mxu0 0.0
        %1352 = vmatpush.msra.mxu0 0.0
        %1353 = vmatpush.msra.mxu0 %v1336
        %1354 = vmatmul.f32.gmra.mxu0 %v1287
        %v1355 = vpop.f32.mrf.mxu0
        %v1356 = vadd.f32 0.0, %v1355
        %1357 = vmatmul.f32.gmra.mxu0 %v1290
        %v1358 = vpop.f32.mrf.mxu0
        %v1359 = vadd.f32 0.0, %v1358
        %1360 = vmatmul.f32.gmra.mxu0 %v1293
        %v1361 = vpop.f32.mrf.mxu0
        %v1362 = vadd.f32 0.0, %v1361
        %1363 = vmatmul.f32.gmra.mxu0 %v1296
        %v1364 = vpop.f32.mrf.mxu0
        %v1365 = vadd.f32 0.0, %v1364
        %1366 = vmatmul.f32.gmra.mxu0 %v1299
        %v1367 = vpop.f32.mrf.mxu0
        %v1368 = vadd.f32 0.0, %v1367
        %1369 = vmatmul.f32.gmra.mxu0 %v1302
        %v1370 = vpop.f32.mrf.mxu0
        %v1371 = vadd.f32 0.0, %v1370
        %1372 = vmatmul.f32.gmra.mxu0 %v1305
        %v1373 = vpop.f32.mrf.mxu0
        %v1374 = vadd.f32 0.0, %v1373
        %1375 = vmatmul.f32.gmra.mxu0 %v1308
        %v1376 = vpop.f32.mrf.mxu0
        %v1377 = vadd.f32 0.0, %v1376
        %1378 = vmatmul.f32.gmra.mxu0 %v1311
        %v1379 = vpop.f32.mrf.mxu0
        %v1380 = vadd.f32 0.0, %v1379
        %1381 = vmatmul.f32.gmra.mxu0 %v1314
        %v1382 = vpop.f32.mrf.mxu0
        %v1383 = vadd.f32 0.0, %v1382
        %1384 = vmatmul.f32.gmra.mxu0 %v1317
        %v1385 = vpop.f32.mrf.mxu0
        %v1386 = vadd.f32 0.0, %v1385
        %1387 = vmatmul.f32.gmra.mxu0 %v1320
        %v1388 = vpop.f32.mrf.mxu0
        %v1389 = vadd.f32 0.0, %v1388
        %1390 = vmatmul.f32.gmra.mxu0 %v1323
        %v1391 = vpop.f32.mrf.mxu0
        %v1392 = vadd.f32 0.0, %v1391
        %1393 = vmatmul.f32.gmra.mxu0 %v1326
        %v1394 = vpop.f32.mrf.mxu0
        %v1395 = vadd.f32 0.0, %v1394
        %1396 = vmatmul.f32.gmra.mxu0 %v1329
        %v1397 = vpop.f32.mrf.mxu0
        %v1398 = vadd.f32 0.0, %v1397
        %1399 = vmatmul.f32.gmra.mxu0 %v1332
        %v1400 = vpop.f32.mrf.mxu0
        %v1401 = vadd.f32 0.0, %v1400
        %1402 = vdwg.mxu0
        %v1404 = vsel %vm954, %v1284, 0
        %1406 = vmatpush.msra.mxu0 0.0
        %1407 = vmatpush.msra.mxu0 0.0
        %1408 = vmatpush.msra.mxu0 0.0
        %1409 = vmatpush.msra.mxu0 0.0
        %1410 = vmatpush.msra.mxu0 0.0
        %1411 = vmatpush.msra.mxu0 0.0
        %1412 = vmatpush.msra.mxu0 0.0
        %1413 = vmatpush.msra.mxu0 0.0
        %1414 = vmatpush.msra.mxu0 0.0
        %1415 = vmatpush.msra.mxu0 0.0
        %1416 = vmatpush.msra.mxu0 0.0
        %1417 = vmatpush.msra.mxu0 0.0
        %1418 = vmatpush.msra.mxu0 0.0
        %1419 = vmatpush.msra.mxu0 0.0
        %1420 = vmatpush.msra.mxu0 0.0
        %1421 = vmatpush.msra.mxu0 %v1336
        %1422 = vmatmul.f32.gmra.mxu0 %v1404
        %v1423 = vpop.f32.mrf.mxu0
        %v1424 = vadd.f32 0.0, %v1423
        %1425 = vdwg.mxu0
        %1442 = vrot.lane.b32.xlu0 %v726, 96
        %v1443 = vpop.permute.xlu0 %1442
        %1444 = vrot.lane.b32.xlu0 %v729, 96
        %v1445 = vpop.permute.xlu0 %1444
        %1446 = vrot.lane.b32.xlu0 %v732, 96
        %v1447 = vpop.permute.xlu0 %1446
        %1448 = vrot.lane.b32.xlu0 %v735, 96
        %v1449 = vpop.permute.xlu0 %1448
        %1450 = vrot.lane.b32.xlu0 %v738, 96
        %v1451 = vpop.permute.xlu0 %1450
        %1452 = vrot.lane.b32.xlu0 %v741, 96
        %v1453 = vpop.permute.xlu0 %1452
        %1454 = vrot.lane.b32.xlu0 %v744, 96
        %v1455 = vpop.permute.xlu0 %1454
        %1456 = vrot.lane.b32.xlu0 %v747, 96
        %v1457 = vpop.permute.xlu0 %1456
        %1458 = vrot.lane.b32.xlu0 %v750, 96
        %v1459 = vpop.permute.xlu0 %1458
        %1460 = vrot.lane.b32.xlu0 %v753, 96
        %v1461 = vpop.permute.xlu0 %1460
        %1462 = vrot.lane.b32.xlu0 %v756, 96
        %v1463 = vpop.permute.xlu0 %1462
        %1464 = vrot.lane.b32.xlu0 %v759, 96
        %v1465 = vpop.permute.xlu0 %1464
        %1466 = vrot.lane.b32.xlu0 %v762, 96
        %v1467 = vpop.permute.xlu0 %1466
        %1468 = vrot.lane.b32.xlu0 %v765, 96
        %v1469 = vpop.permute.xlu0 %1468
        %1470 = vrot.lane.b32.xlu0 %v768, 96
        %v1471 = vpop.permute.xlu0 %1470
        %1472 = vrot.lane.b32.xlu0 %v771, 96
        %v1473 = vpop.permute.xlu0 %1472
        %v1490 = vmul.f32 %v1356, %v1443
        %v1491 = vmul.f32 %v1359, %v1445
        %v1492 = vmul.f32 %v1362, %v1447
        %v1493 = vmul.f32 %v1365, %v1449
        %v1494 = vmul.f32 %v1368, %v1451
        %v1495 = vmul.f32 %v1371, %v1453
        %v1496 = vmul.f32 %v1374, %v1455
        %v1497 = vmul.f32 %v1377, %v1457
        %v1498 = vmul.f32 %v1380, %v1459
        %v1499 = vmul.f32 %v1383, %v1461
        %v1500 = vmul.f32 %v1386, %v1463
        %v1501 = vmul.f32 %v1389, %v1465
        %v1502 = vmul.f32 %v1392, %v1467
        %v1503 = vmul.f32 %v1395, %v1469
        %v1504 = vmul.f32 %v1398, %v1471
        %v1505 = vmul.f32 %v1401, %v1473
        %v1506 = vsel %vm454, %v1490, 0.0
        %v1507 = vsel %vm454, %v1491, 0.0
        %v1508 = vadd.f32 %v1506, %v1507
        %v1509 = vrot.slane %v1508, 4
        %v1510 = vadd.f32 %v1508, %v1509
        %v1511 = vrot.slane %v1510, 2
        %v1512 = vadd.f32 %v1510, %v1511
        %v1513 = vrot.slane %v1512, 1
        %v1514 = vadd.f32 %v1512, %v1513
        %v1515 = vsel %vm454, %v1492, 0.0
        %v1516 = vsel %vm454, %v1493, 0.0
        %v1517 = vadd.f32 %v1515, %v1516
        %v1518 = vrot.slane %v1517, 4
        %v1519 = vadd.f32 %v1517, %v1518
        %v1520 = vrot.slane %v1519, 2
        %v1521 = vadd.f32 %v1519, %v1520
        %v1522 = vrot.slane %v1521, 1
        %v1523 = vadd.f32 %v1521, %v1522
        %v1524 = vsel %vm454, %v1494, 0.0
        %v1525 = vsel %vm454, %v1495, 0.0
        %v1526 = vadd.f32 %v1524, %v1525
        %v1527 = vrot.slane %v1526, 4
        %v1528 = vadd.f32 %v1526, %v1527
        %v1529 = vrot.slane %v1528, 2
        %v1530 = vadd.f32 %v1528, %v1529
        %v1531 = vrot.slane %v1530, 1
        %v1532 = vadd.f32 %v1530, %v1531
        %v1533 = vsel %vm454, %v1496, 0.0
        %v1534 = vsel %vm454, %v1497, 0.0
        %v1535 = vadd.f32 %v1533, %v1534
        %v1536 = vrot.slane %v1535, 4
        %v1537 = vadd.f32 %v1535, %v1536
        %v1538 = vrot.slane %v1537, 2
        %v1539 = vadd.f32 %v1537, %v1538
        %v1540 = vrot.slane %v1539, 1
        %v1541 = vadd.f32 %v1539, %v1540
        %v1542 = vsel %vm454, %v1498, 0.0
        %v1543 = vsel %vm454, %v1499, 0.0
        %v1544 = vadd.f32 %v1542, %v1543
        %v1545 = vrot.slane %v1544, 4
        %v1546 = vadd.f32 %v1544, %v1545
        %v1547 = vrot.slane %v1546, 2
        %v1548 = vadd.f32 %v1546, %v1547
        %v1549 = vrot.slane %v1548, 1
        %v1550 = vadd.f32 %v1548, %v1549
        %v1551 = vsel %vm454, %v1500, 0.0
        %v1552 = vsel %vm454, %v1501, 0.0
        %v1553 = vadd.f32 %v1551, %v1552
        %v1554 = vrot.slane %v1553, 4
        %v1555 = vadd.f32 %v1553, %v1554
        %v1556 = vrot.slane %v1555, 2
        %v1557 = vadd.f32 %v1555, %v1556
        %v1558 = vrot.slane %v1557, 1
        %v1559 = vadd.f32 %v1557, %v1558
        %v1560 = vsel %vm454, %v1502, 0.0
        %v1561 = vsel %vm454, %v1503, 0.0
        %v1562 = vadd.f32 %v1560, %v1561
        %v1563 = vrot.slane %v1562, 4
        %v1564 = vadd.f32 %v1562, %v1563
        %v1565 = vrot.slane %v1564, 2
        %v1566 = vadd.f32 %v1564, %v1565
        %v1567 = vrot.slane %v1566, 1
        %v1568 = vadd.f32 %v1566, %v1567
        %v1569 = vsel %vm454, %v1504, 0.0
        %v1570 = vsel %vm454, %v1505, 0.0
        %v1571 = vadd.f32 %v1569, %v1570
        %v1572 = vrot.slane %v1571, 4
        %v1573 = vadd.f32 %v1571, %v1572
        %v1574 = vrot.slane %v1573, 2
        %v1575 = vadd.f32 %v1573, %v1574
        %v1576 = vrot.slane %v1575, 1
        %v1577 = vadd.f32 %v1575, %v1576
        %1579 = vrot.lane.b32.xlu0 %v640, 96
        %v1580 = vpop.permute.xlu0 %1579
        %v1582 = vmul.f32 %v1424, %v1580
        %v1584 = vrot.slane %v1582, 1
        %v1585 = vrot.slane %v1582, 2
        %v1586 = vrot.slane %v1582, 3
        %v1587 = vrot.slane %v1582, 4
        %v1588 = vrot.slane %v1582, 5
        %v1589 = vrot.slane %v1582, 6
        %v1590 = vrot.slane %v1582, 7
        %v1599 = vadd.f32 %v1514, %v1582
        %v1600 = vadd.f32 %v1523, %v1584
        %v1601 = vadd.f32 %v1532, %v1585
        %v1602 = vadd.f32 %v1541, %v1586
        %v1603 = vadd.f32 %v1550, %v1587
        %v1604 = vadd.f32 %v1559, %v1588
        %v1605 = vadd.f32 %v1568, %v1589
        %v1606 = vadd.f32 %v1577, %v1590
        %v1607 = vld [vmem:[%s7] sm:$0xff]
        %v1608 = vld [vmem:[%s7 + $0x8] sm:$0xff]
        %v1609 = vld [vmem:[%s7 + $0x10] sm:$0xff]
        %v1610 = vld [vmem:[%s7 + $0x18] sm:$0xff]
        %v1611 = vld [vmem:[%s8] sm:$0x1]
        %v1613 = vperm.slane %v1611, 0
        %v1623 = vrot.slane %v1600, 7
        %v1624 = vsel %vm571, %v1623, %v1599
        %v1625 = vrot.slane %v1601, 6
        %v1626 = vsel %vm574, %v1625, %v1624
        %v1627 = vrot.slane %v1602, 5
        %v1628 = vsel %vm577, %v1627, %v1626
        %v1629 = vrot.slane %v1603, 4
        %v1630 = vsel %vm580, %v1629, %v1628
        %v1631 = vrot.slane %v1604, 3
        %v1632 = vsel %vm583, %v1631, %v1630
        %v1633 = vrot.slane %v1605, 2
        %v1634 = vsel %vm586, %v1633, %v1632
        %v1635 = vrot.slane %v1606, 1
        %v1636 = vsel %vm589, %v1635, %v1634
        %v1637 = vsel %vm454, %v1636, 0
        %1639 = vmatpush.msra.mxu0 0.0
        %1640 = vmatpush.msra.mxu0 0.0
        %1641 = vmatpush.msra.mxu0 0.0
        %1642 = vmatpush.msra.mxu0 0.0
        %1643 = vmatpush.msra.mxu0 0.0
        %1644 = vmatpush.msra.mxu0 0.0
        %1645 = vmatpush.msra.mxu0 0.0
        %1646 = vmatpush.msra.mxu0 0.0
        %1647 = vmatpush.msra.mxu0 0.0
        %1648 = vmatpush.msra.mxu0 0.0
        %1649 = vmatpush.msra.mxu0 0.0
        %1650 = vmatpush.msra.mxu0 0.0
        %1651 = vmatpush.msra.mxu0 %v1610
        %1652 = vmatpush.msra.mxu0 %v1609
        %1653 = vmatpush.msra.mxu0 %v1608
        %1654 = vmatpush.msra.mxu0 %v1607
        %1655 = vmatmul.f32.gmra.mxu0 %v1637
        %v1656 = vpop.f32.mrf.mxu0
        %v1657 = vadd.f32 %v1613, %v1656
        %1658 = vdwg.mxu0
        %vm1659 = vcmask 130048
        %1660 = vst.msk [vmem:[%s436] sm:$0xff] %vm1659, %v1657
        %s1661 = sand.u32 %s273, 1
        %s1662 = scalar_lea.sflag [#allocation4], %s1661
        %s1663 = sand.u32 %s273, 1
        %s1664 = smul.addr %s1663, 8
        %s1665 = scalar_lea.vmem [#allocation8], %s1664
        // Predicated region
        $region77: #{tpu_custom_call.1} parent=63 // pred_check
          %p1666 = pneg %p283
        $region78: #{tpu_custom_call.1} parent=63 // pred_check_branch
          %1668 = sbr.rel (%p1666) target = $region80
        $region79: #{tpu_custom_call.1} parent=63 // pred_region
          %1670 = vsyncadd %s1662, 0
          %s1671 = smul.addr %s29, 8
          %s1672 = scalar_lea.hbm %s11, %s1671
          %s1674 = sshll.u32 %s1665, 4
          %s1675 = int_to_ptr.vmem [resolvable:$true] %s1674
          %s1676 = sshll.u32 %s1672, 4
          %s1677 = int_to_ptr.hbm [resolvable:$true] %s1676
          %1679 = dma.vmem_to_hbm [thread:$0]  %s1675, 128, %s1677, %s1662
        $region80: #{tpu_custom_call.1} parent=63 // pred_fallthru
          _
      $region64: #{tpu_custom_call.1} parent=5 // pred_fallthru
        _
      %p1680 = scmp.le.s32.totalorder 2, %s24
      // Predicated region
      $region81: #{tpu_custom_call.1} parent=5 // pred_check
        %p1681 = pneg %p1680
      $region82: #{tpu_custom_call.1} parent=5 // pred_check_branch
        %1683 = sbr.rel (%p1681) target = $region84
      $region83: #{tpu_custom_call.1} parent=5 // pred_region
        %s1684 = ssub.s32 %s24, 2
        // Predicated region
        $region85: #{tpu_custom_call.1} parent=83 // pred_check
          %p1685 = pneg %p289
        $region86: #{tpu_custom_call.1} parent=83 // pred_check_branch
          %1687 = sbr.rel (%p1685) target = $region88
        $region87: #{tpu_custom_call.1} parent=83 // pred_region
          %s1688 = sand.u32 %s274, 1
          %s1689 = scalar_lea.sflag [#allocation4], %s1688
          %s1690 = sand.u32 %s274, 1
          %s1691 = smul.addr %s1690, 8
          %s1692 = scalar_lea.vmem [#allocation8], %s1691
          %1694 = dma.done %s1689, 128
        $region88: #{tpu_custom_call.1} parent=83 // pred_fallthru
          _
      $region84: #{tpu_custom_call.1} parent=5 // pred_fallthru
        _
    $region6: #{tpu_custom_call.1} parent=1 // loop_footer
      %s28 = sadd.s32 1, %s24
    $region7: #{tpu_custom_call.1} parent=1 // loop_footer_branch
      %23 = sbr.rel target = $region3
    $region8: #{tpu_custom_call.1} parent=1 // loop_exit
      _
    %1695 = vsyncpa [#allocation3], 1
    %s1696 = scalar_lea.sflag [#allocation3], 1
    %1697 = vsyncpa %s1696, 1
    %1698 = vsyncpa [#allocation6], 1
    %1699 = vsyncpa [#allocation4], 1
    %s1700 = scalar_lea.sflag [#allocation4], 1
    %1701 = vsyncpa %s1700, 1

</llo_original>
